<compile_context>
chip_gen: v5e
topology: v5e:2x2
jax: 0.10.0
libtpu: 0.0.40
codegen_flags: <defaults>
</compile_context>

<pallas_src>
import math

import jax
import jax.numpy as jnp
from jax.experimental import pallas as pl
from jax.experimental.pallas import tpu as pltpu

D_STATE = 16
D_CONV = 4
EXPAND = 2

_VMEM_LIMIT = 32 * 1024 * 1024   # leaves headroom under v7x's 64 MiB / TC


def _pick_chunk(L, prefer=(64, 32, 16, 8)):
    """Largest preferred L-chunk that divides L with >=2 chunks, else full L."""
    for c in prefer:
        if L % c == 0 and L > c:
            return c
    return L


# ----------------------------------------------------------------------------
# Tiled linear (bf16 MXU operands, fp32 accumulation), grid over rows.
# ----------------------------------------------------------------------------

def _linear_kernel(x_ref, w_ref, o_ref):
    o_ref[...] = jnp.dot(x_ref[...], w_ref[...],
                         preferred_element_type=jnp.float32)


def _linear_bias_kernel(x_ref, w_ref, b_ref, o_ref):
    o_ref[...] = (jnp.dot(x_ref[...], w_ref[...],
                          preferred_element_type=jnp.float32) + b_ref[...])


def linear(x, w, b=None, tile_m=512):
    """x: (M, K) @ w: (K, N) [+ b] -> (M, N) fp32.

    Rows are tiled (HBM<->VMEM double buffering); weights stay VMEM-resident.
    # TODO(synk): add K/N tiling + fp32 accumulator scratch for huge weights.
    """
    M, K = x.shape
    N = w.shape[1]
    tm = M if M <= tile_m else tile_m
    grid = (pl.cdiv(M, tm),)
    x_bf = x.astype(jnp.bfloat16)
    w_bf = w.astype(jnp.bfloat16)
    in_specs = [pl.BlockSpec((tm, K), lambda i: (i, 0)),
                pl.BlockSpec((K, N), lambda i: (0, 0))]
    args = [x_bf, w_bf]
    kernel = _linear_kernel
    if b is not None:
        in_specs.append(pl.BlockSpec((1, N), lambda i: (0, 0)))
        args.append(b.reshape(1, N).astype(jnp.float32))
        kernel = _linear_bias_kernel
    return pl.pallas_call(
        kernel,
        grid=grid,
        out_shape=jax.ShapeDtypeStruct((M, N), jnp.float32),
        in_specs=in_specs,
        out_specs=pl.BlockSpec((tm, N), lambda i: (i, 0)),
        compiler_params=pltpu.CompilerParams(
            dimension_semantics=("parallel",),
            vmem_limit_bytes=_VMEM_LIMIT),
    )(*args)


# ----------------------------------------------------------------------------
# Fused (residual add ->) LayerNorm -> in_proj (split into x / z halves)
# ----------------------------------------------------------------------------

def _ln_inproj_kernel(h_ref, g_ref, b_ref, wx_ref, wz_ref, x_ref, z_ref):
    res = h_ref[...]
    mean = jnp.mean(res, axis=-1, keepdims=True)
    d = res - mean
    var = jnp.mean(d * d, axis=-1, keepdims=True)
    ln = (d * jax.lax.rsqrt(var + 1e-5) * g_ref[...] + b_ref[...]
          ).astype(jnp.bfloat16)
    x_ref[...] = jnp.dot(ln, wx_ref[...], preferred_element_type=jnp.float32)
    z_ref[...] = jnp.dot(ln, wz_ref[...], preferred_element_type=jnp.float32)


def _add_ln_inproj_kernel(h_ref, r_ref, g_ref, b_ref, wx_ref, wz_ref,
                          res_ref, x_ref, z_ref):
    res = h_ref[...] + r_ref[...]
    res_ref[...] = res
    mean = jnp.mean(res, axis=-1, keepdims=True)
    d = res - mean
    var = jnp.mean(d * d, axis=-1, keepdims=True)
    ln = (d * jax.lax.rsqrt(var + 1e-5) * g_ref[...] + b_ref[...]
          ).astype(jnp.bfloat16)
    x_ref[...] = jnp.dot(ln, wx_ref[...], preferred_element_type=jnp.float32)
    z_ref[...] = jnp.dot(ln, wz_ref[...], preferred_element_type=jnp.float32)


def add_ln_in_proj(h2, r2, gamma, beta, in_proj_w, tile_m=256):
    """h2, r2: (M, D).  Returns (residual_or_None, x_half, z_half)."""
    M, D = h2.shape
    d_inner = in_proj_w.shape[1] // 2
    tm = M if M <= tile_m else tile_m
    grid = (pl.cdiv(M, tm),)
    wx = in_proj_w[:, :d_inner].astype(jnp.bfloat16)
    wz = in_proj_w[:, d_inner:].astype(jnp.bfloat16)
    g = gamma.reshape(1, D).astype(jnp.float32)
    bvec = beta.reshape(1, D).astype(jnp.float32)
    row = pl.BlockSpec((tm, D), lambda i: (i, 0))
    vec = pl.BlockSpec((1, D), lambda i: (0, 0))
    wsp = pl.BlockSpec((D, d_inner), lambda i: (0, 0))
    inner = pl.BlockSpec((tm, d_inner), lambda i: (i, 0))
    cp = pltpu.CompilerParams(dimension_semantics=("parallel",),
                              vmem_limit_bytes=_VMEM_LIMIT)
    if r2 is None:   # residual is None: skip the add (no zero tensor round trip)
        x2, z2 = pl.pallas_call(
            _ln_inproj_kernel, grid=grid,
            out_shape=(jax.ShapeDtypeStruct((M, d_inner), jnp.float32),
                       jax.ShapeDtypeStruct((M, d_inner), jnp.float32)),
            in_specs=[row, vec, vec, wsp, wsp],
            out_specs=(inner, inner),
            compiler_params=cp,
        )(h2, g, bvec, wx, wz)
        return None, x2, z2
    res2, x2, z2 = pl.pallas_call(
        _add_ln_inproj_kernel, grid=grid,
        out_shape=(jax.ShapeDtypeStruct((M, D), jnp.float32),
                   jax.ShapeDtypeStruct((M, d_inner), jnp.float32),
                   jax.ShapeDtypeStruct((M, d_inner), jnp.float32)),
        in_specs=[row, row, vec, vec, wsp, wsp],
        out_specs=(row, inner, inner),
        compiler_params=cp,
    )(h2, r2, g, bvec, wx, wz)
    return res2, x2, z2


# ----------------------------------------------------------------------------
# Depthwise causal conv1d + SiLU + x_proj(B/C columns), L chunked with a VMEM
# halo (aligned 8-row seam, no HBM pad copy).  B/C projection reuses the
# in-VMEM conv output (saves one (B, L, d_inner) HBM read).
# ----------------------------------------------------------------------------

def _conv_silu_bc_kernel(x_ref, w_ref, b_ref, wbc_ref, xc_ref, bc_ref, halo_ref):
    CH, D = xc_ref.shape
    K = w_ref.shape[0]
    H = halo_ref.shape[0]            # 8-row halo buffer; last K-1 rows are live

    @pl.when(pl.program_id(1) == 0)
    def _():
        halo_ref[...] = jnp.zeros_like(halo_ref)

    x = x_ref[...]                                        # (CH, D)
    xe = jnp.concatenate([halo_ref[...], x], axis=0)      # (H + CH, D), aligned seam
    off = H - (K - 1)
    acc = xe[off:off + CH, :] * w_ref[0:1, :]
    for k in range(1, K):                                 # K is small & static
        acc = acc + xe[off + k:off + k + CH, :] * w_ref[k:k + 1, :]
    acc = acc + b_ref[...]
    if CH >= H:                                           # carry halo forward
        halo_ref[...] = x[CH - H:, :]
    xc = acc * jax.nn.sigmoid(acc)                        # SiLU
    xc_ref[...] = xc
    bc_ref[...] = jnp.dot(xc.astype(jnp.bfloat16), wbc_ref[...],
                          preferred_element_type=jnp.float32)


def causal_conv1d_silu_bc(x, w, b, w_bc, CH):
    """x: (B, L, D), w: (K, D), b: (D,), w_bc: (D, 2N).

    Returns (xc: (B, L, D) fp32 SiLU(conv(x)), bc: (B, L, 2N) fp32)."""
    Bb, L, D = x.shape
    K = w.shape[0]
    NBC = w_bc.shape[1]
    grid = (Bb, L // CH)
    seq = pl.BlockSpec((None, CH, D), lambda bi, ci: (bi, ci, 0))
    return pl.pallas_call(
        _conv_silu_bc_kernel,
        grid=grid,
        out_shape=(jax.ShapeDtypeStruct((Bb, L, D), jnp.float32),
                   jax.ShapeDtypeStruct((Bb, L, NBC), jnp.float32)),
        in_specs=[
            seq,
            pl.BlockSpec((K, D), lambda bi, ci: (0, 0)),
            pl.BlockSpec((1, D), lambda bi, ci: (0, 0)),
            pl.BlockSpec((D, NBC), lambda bi, ci: (0, 0)),
        ],
        out_specs=(seq,
                   pl.BlockSpec((None, CH, NBC), lambda bi, ci: (bi, ci, 0))),
        scratch_shapes=[pltpu.VMEM((8, D), jnp.float32)],
        compiler_params=pltpu.CompilerParams(
            dimension_semantics=("parallel", "arbitrary"),
            vmem_limit_bytes=_VMEM_LIMIT),
    )(x.astype(jnp.float32), w.astype(jnp.float32),
      b.reshape(1, D).astype(jnp.float32), w_bc.astype(jnp.bfloat16))


# ----------------------------------------------------------------------------
# Fused x_proj(dt cols) + dt_proj + selective scan + SiLU(z) gate + out_proj
# ----------------------------------------------------------------------------

def _dt_scan_gate_outproj_kernel(xc_ref, z_ref, bct_ref, wdti_ref, wdtp_ref,
                                 dtb_ref, at_ref, dvec_ref, wout_ref,
                                 o_ref, h_ref):
    CH, Din = xc_ref.shape
    N = at_ref.shape[0]

    @pl.when(pl.program_id(1) == 0)
    def _():
        h_ref[...] = jnp.zeros_like(h_ref)

    xc = xc_ref[...]                                      # (CH, Din) fp32
    z = z_ref[...]                                        # (CH, Din) fp32
    bct = bct_ref[...]                                    # (2N, CH) fp32, time-minor

    # fused x_proj (dt columns) + dt_proj: bulk MXU, off the recurrence path.
    dt_low = jnp.dot(xc.astype(jnp.bfloat16), wdti_ref[...],
                     preferred_element_type=jnp.float32)              # (CH, R)
    dt_raw = (jnp.dot(dt_low.astype(jnp.bfloat16), wdtp_ref[...],
                      preferred_element_type=jnp.float32) + dtb_ref[...])

    # bulk per-chunk elementwise (EUP/VPU), hoisted off the serial chain.
    dt = jax.nn.softplus(dt_raw)                          # (CH, Din)
    dtu = dt * xc                                         # (CH, Din)
    gate = z * jax.nn.sigmoid(z)                          # SiLU(z)
    at = at_ref[...]                                      # (N, Din)

    # serial recurrence, fully unrolled over the chunk: VPU broadcast mul/adds.
    h = h_ref[...]                                        # (N, Din)
    ys = []
    for t in range(CH):
        dA_t = jnp.exp(dt[t:t + 1, :] * at)               # (N, Din); data-indep of h
        b_col = bct[0:N, t:t + 1]                         # (N, 1) static slice
        c_col = bct[N:2 * N, t:t + 1]                     # (N, 1)
        h = dA_t * h + b_col * dtu[t:t + 1, :]            # VPU outer product
        ys.append(jnp.sum(h * c_col, axis=0, keepdims=True))
    h_ref[...] = h

    y = jnp.concatenate(ys, axis=0)                       # (CH, Din)
    yg = ((y + dvec_ref[...] * xc) * gate).astype(jnp.bfloat16)
    o_ref[...] = jnp.dot(yg, wout_ref[...], preferred_element_type=jnp.float32)


def selective_scan_out_proj(xc, z, bct4, w_dt_in, dt_proj_w, dt_proj_b,
                            AT, Dvec, out_proj_w, CH):
    """xc, z: (B, L, Din); bct4: (B, L/CH, 2N, CH) time-minor B/C.

    Returns out_proj(gated scan output): (B, L, d_model) fp32."""
    Bb, L, Din = xc.shape
    N = AT.shape[0]
    R = w_dt_in.shape[1]
    d_model = out_proj_w.shape[1]
    nc = L // CH
    grid = (Bb, nc)
    seq = pl.BlockSpec((None, CH, Din), lambda bi, ci: (bi, ci, 0))
    return pl.pallas_call(
        _dt_scan_gate_outproj_kernel,
        grid=grid,
        out_shape=jax.ShapeDtypeStruct((Bb, L, d_model), jnp.float32),
        in_specs=[
            seq,                                                        # xc
            seq,                                                        # z
            pl.BlockSpec((None, None, 2 * N, CH),
                         lambda bi, ci: (bi, ci, 0, 0)),                # B/C time-minor
            pl.BlockSpec((Din, R), lambda bi, ci: (0, 0)),              # x_proj dt cols
            pl.BlockSpec((R, Din), lambda bi, ci: (0, 0)),              # dt_proj weight
            pl.BlockSpec((1, Din), lambda bi, ci: (0, 0)),              # dt_proj bias
            pl.BlockSpec((N, Din), lambda bi, ci: (0, 0)),              # A^T
            pl.BlockSpec((1, Din), lambda bi, ci: (0, 0)),              # D
            pl.BlockSpec((Din, d_model), lambda bi, ci: (0, 0)),        # out_proj weight
        ],
        out_specs=pl.BlockSpec((None, CH, d_model), lambda bi, ci: (bi, ci, 0)),
        scratch_shapes=[pltpu.VMEM((N, Din), jnp.float32)],              # carried h
        compiler_params=pltpu.CompilerParams(
            dimension_semantics=("parallel", "arbitrary"),
            vmem_limit_bytes=_VMEM_LIMIT),
    )(xc, z, bct4,
      w_dt_in.astype(jnp.bfloat16), dt_proj_w.astype(jnp.bfloat16),
      dt_proj_b.reshape(1, Din).astype(jnp.float32),
      AT.astype(jnp.float32), Dvec.reshape(1, Din).astype(jnp.float32),
      out_proj_w.astype(jnp.bfloat16))


# ----------------------------------------------------------------------------
# Model glue: parameters, Mamba mixer, token interleaving
# ----------------------------------------------------------------------------

def init_params(key, inner_dim, cond_dim):
    d_inner = EXPAND * inner_dim
    dt_rank = math.ceil(inner_dim / 16)
    ks = jax.random.split(key, 8)
    s = 0.02
    f32 = jnp.float32
    return {
        "cond_affine_w": jax.random.normal(ks[0], (cond_dim, inner_dim), f32) * s,
        "cond_affine_b": jnp.zeros((inner_dim,), f32),
        "ln_w": jnp.ones((inner_dim,), f32),
        "ln_b": jnp.zeros((inner_dim,), f32),
        "in_proj_w": jax.random.normal(ks[1], (inner_dim, 2 * d_inner), f32) * s,
        "conv_w": jax.random.normal(ks[2], (D_CONV, d_inner), f32) * s,
        "conv_b": jnp.zeros((d_inner,), f32),
        "x_proj_w": jax.random.normal(ks[3], (d_inner, dt_rank + 2 * D_STATE), f32) * s,
        "dt_proj_w": jax.random.normal(ks[4], (dt_rank, d_inner), f32) * s,
        "dt_proj_b": jax.random.normal(ks[5], (d_inner,), f32) * 0.1,
        "A_log": jnp.log(jnp.broadcast_to(
            jnp.arange(1, D_STATE + 1, dtype=f32), (d_inner, D_STATE))),
        "D": jnp.ones((d_inner,), f32),
        "out_proj_w": jax.random.normal(ks[6], (d_inner, inner_dim), f32) * s,
    }


def mamba_mixer(params, x2, z2, B, L):
    """Mamba mixer body after the fused LN+in_proj.  x2, z2: (B*L, d_inner)."""
    d_inner = params["in_proj_w"].shape[1] // 2
    d_state = params["A_log"].shape[1]
    dt_rank = params["dt_proj_w"].shape[0]

    CH = _pick_chunk(L)
    nc = L // CH

    xin = x2.reshape(B, L, d_inner)
    z = z2.reshape(B, L, d_inner)

    # Conv + SiLU + B/C projection fused (B/C computed from the in-VMEM xc).
    w_bc = params["x_proj_w"][:, dt_rank:]                             # (d_inner, 2N)
    xc, bc = causal_conv1d_silu_bc(xin, params["conv_w"], params["conv_b"],
                                   w_bc, CH)

    # Cheap relayout so the scan kernel reads per-timestep (N, 1) columns with
    # static slices (no per-step gather matmuls, no in-kernel transposes).
    bct4 = bc.reshape(B, nc, CH, 2 * d_state).transpose(0, 1, 3, 2)    # (B,nc,2N,CH)

    AT = -jnp.exp(params["A_log"]).T                                   # (N, d_inner)
    out = selective_scan_out_proj(xc, z, bct4,
                                  params["x_proj_w"][:, :dt_rank],
                                  params["dt_proj_w"], params["dt_proj_b"],
                                  AT, params["D"], params["out_proj_w"], CH)
    return out                                                         # (B, L, d_model)


def condition_modulation_block(params, hidden_states, residual, cond, mod,
                               token_pnum, token_num):
    """Forward of ConditionModulationBlock.  `mod` is unused (matches reference)."""
    del mod
    B = hidden_states.shape[0]
    inner_dim = params["cond_affine_w"].shape[1]
    cond_dim = cond.shape[-1]
    COND_LEN = cond.shape[1]
    TOKEN_LEN = token_num
    assert TOKEN_LEN % token_pnum == 0, f"error token number {TOKEN_LEN}."
    TOKEN_PLEN = TOKEN_LEN // token_pnum
    PART_LEN = COND_LEN + TOKEN_PLEN

    prepend = linear(cond.reshape(-1, cond_dim),
                     params["cond_affine_w"], params["cond_affine_b"]
                     ).reshape(B, COND_LEN, inner_dim)

    if residual is None:
        parts = []
        for idx in range(token_pnum):
            parts += [prepend,
                      hidden_states[:, idx * TOKEN_PLEN:(idx + 1) * TOKEN_PLEN]]
        hidden_states = jnp.concatenate(parts, axis=1)
    else:
        hs, rs = [], []
        for idx in range(token_pnum):
            hs.append(hidden_states[:, idx * PART_LEN:(idx + 1) * PART_LEN][:, COND_LEN:])
            rs.append(residual[:, idx * PART_LEN:(idx + 1) * PART_LEN][:, COND_LEN:])
        hidden_states = jnp.concatenate(hs, axis=1)
        residual = jnp.concatenate(rs, axis=1)
        hs, rs = [], []
        for idx in range(token_pnum):
            hs += [prepend, hidden_states[:, idx * TOKEN_PLEN:(idx + 1) * TOKEN_PLEN]]
            rs += [jnp.zeros_like(prepend),
                   residual[:, idx * TOKEN_PLEN:(idx + 1) * TOKEN_PLEN]]
        hidden_states = jnp.concatenate(hs, axis=1)
        residual = jnp.concatenate(rs, axis=1)

    # Block: Add -> LayerNorm -> in_proj (fused), then the rest of the mixer.
    L = hidden_states.shape[1]
    h2 = hidden_states.reshape(B * L, inner_dim)
    r2 = residual.reshape(B * L, inner_dim) if residual is not None else None
    res2, x2, z2 = add_ln_in_proj(h2, r2, params["ln_w"], params["ln_b"],
                                  params["in_proj_w"])
    residual_out = (res2.reshape(B, L, inner_dim)
                    if res2 is not None else hidden_states)
    hidden_out = mamba_mixer(params, x2, z2, B, L)
    return hidden_out, residual_out


# ----------------------------------------------------------------------------
# Demo
# ----------------------------------------------------------------------------

if __name__ == "__main__":
    key = jax.random.PRNGKey(0)
    B, inner_dim, cond_dim, mod_dim = 2, 32, 16, 8
    token_pnum, token_num = 2, 8
    cond_len = 4

    kp, kh, kc, km = jax.random.split(key, 4)
    params = init_params(kp, inner_dim, cond_dim)
    hidden_states = jax.random.normal(kh, (B, token_num, inner_dim), jnp.float32)
    cond = jax.random.normal(kc, (B, cond_len, cond_dim), jnp.float32)
    mod = jax.random.normal(km, (B, mod_dim), jnp.float32)   # unused by forward

    fwd = jax.jit(condition_modulation_block, static_argnums=(5, 6))

    # First block: residual is None.
    out_h, out_r = fwd(params, hidden_states, None, cond, mod,
                       token_pnum, token_num)
    jax.block_until_ready(out_h)
    jax.block_until_ready(out_r)

    L_out = token_pnum * (cond_len + token_num // token_pnum)
    assert out_h.shape == (B, L_out, inner_dim)
    assert out_r.shape == (B, L_out, inner_dim)

    # Second block: exercises the residual (add+LN fused) branch.
    out_h2, out_r2 = fwd(params, out_h, out_r, cond, mod,
                         token_pnum, token_num)
    jax.block_until_ready(out_h2)
    jax.block_until_ready(out_r2)
    assert out_h2.shape == (B, L_out, inner_dim)
    assert out_r2.shape == (B, L_out, inner_dim)
    print("KERNEL_OK")
</pallas_src>

<mosaic_0001>
module attributes {stable_mosaic.version = 11 : i64} {
  func.func @_linear_bias_kernel(%arg0: i32, %arg1: memref<8x16xbf16, #tpu.memory_space<vmem>>, %arg2: memref<16x32xbf16, #tpu.memory_space<vmem>>, %arg3: memref<1x32xf32, #tpu.memory_space<vmem>>, %arg4: memref<8x32xf32, #tpu.memory_space<vmem>>) attributes {dimension_semantics = [#tpu.dimension_semantics<parallel>], iteration_bounds = array<i64: 1>, scalar_prefetch = 0 : i64, scratch_operands = 0 : i64, tpu.core_type = #tpu.core_type<tc>, window_params = [{transform_indices = @transform_0, window_bounds = array<i64: 8, 16>}, {pipeline_mode = #tpu.pipeline_mode<synchronous>, transform_indices = @transform_1, window_bounds = array<i64: 16, 32>}, {pipeline_mode = #tpu.pipeline_mode<synchronous>, transform_indices = @transform_2, window_bounds = array<i64: 1, 32>}, {transform_indices = @transform_3, window_bounds = array<i64: 8, 32>}]} {
    %c0 = arith.constant 0 : index
    %c0_0 = arith.constant 0 : index
    %0 = vector.load %arg1[%c0, %c0_0] : memref<8x16xbf16, #tpu.memory_space<vmem>>, vector<8x16xbf16>
    %c0_1 = arith.constant 0 : index
    %c0_2 = arith.constant 0 : index
    %1 = vector.load %arg2[%c0_1, %c0_2] : memref<16x32xbf16, #tpu.memory_space<vmem>>, vector<16x32xbf16>
    %cst = arith.constant dense<0.000000e+00> : vector<8x32xf32>
    %2 = tpu.matmul %0, %1, %cst {dimension_numbers = #tpu.dot_dimension_numbers<[1], [0], [0], [1], [0, 0, 1, 1], [], []>} : vector<8x16xbf16>, vector<16x32xbf16>, vector<8x32xf32> -> vector<8x32xf32>
    %c0_3 = arith.constant 0 : index
    %c0_4 = arith.constant 0 : index
    %3 = vector.load %arg3[%c0_3, %c0_4] : memref<1x32xf32, #tpu.memory_space<vmem>>, vector<1x32xf32>
    %4 = vector.broadcast %3 : vector<1x32xf32> to vector<8x32xf32>
    %5 = arith.addf %2, %4 : vector<8x32xf32>
    %c0_5 = arith.constant 0 : index
    %c0_6 = arith.constant 0 : index
    %6 = vector.load %arg4[%c0_5, %c0_6] : memref<8x32xf32, #tpu.memory_space<vmem>>, vector<8x32xf32>
    tpu.vector_store %arg4[%c0_5, %c0_6], %5 {strides = array<i32>} : memref<8x32xf32, #tpu.memory_space<vmem>>, vector<8x32xf32>,
    return
  }
  func.func @transform_0(%arg0: i32) -> (i32, i32) {
    %c0_i32 = arith.constant 0 : i32
    %c0_i32_0 = arith.constant 0 : i32
    return %arg0, %c0_i32 : i32, i32
  }
  func.func @transform_1(%arg0: i32) -> (i32, i32) {
    %c0_i32 = arith.constant 0 : i32
    %c0_i32_0 = arith.constant 0 : i32
    %c0_i32_1 = arith.constant 0 : i32
    return %c0_i32, %c0_i32_0 : i32, i32
  }
  func.func @transform_2(%arg0: i32) -> (i32, i32) {
    %c0_i32 = arith.constant 0 : i32
    %c0_i32_0 = arith.constant 0 : i32
    %c0_i32_1 = arith.constant 0 : i32
    return %c0_i32, %c0_i32_0 : i32, i32
  }
  func.func @transform_3(%arg0: i32) -> (i32, i32) {
    %c0_i32 = arith.constant 0 : i32
    %c0_i32_0 = arith.constant 0 : i32
    return %arg0, %c0_i32 : i32, i32
  }
}

module attributes {stable_mosaic.version = 11 : i64} {
  func.func @_conv_silu_bc_kernel(%arg0: i32, %arg1: i32, %arg2: memref<1x8x64xf32, #tpu.memory_space<vmem>>, %arg3: memref<4x64xf32, #tpu.memory_space<vmem>>, %arg4: memref<1x64xf32, #tpu.memory_space<vmem>>, %arg5: memref<64x32xbf16, #tpu.memory_space<vmem>>, %arg6: memref<1x8x64xf32, #tpu.memory_space<vmem>>, %arg7: memref<1x8x32xf32, #tpu.memory_space<vmem>>, %arg8: memref<8x64xf32, #tpu.memory_space<vmem>>) attributes {dimension_semantics = [#tpu.dimension_semantics<parallel>, #tpu.dimension_semantics<arbitrary>], iteration_bounds = array<i64: 2, 2>, scalar_prefetch = 0 : i64, scratch_operands = 1 : i64, tpu.core_type = #tpu.core_type<tc>, window_params = [{transform_indices = @transform_0, window_bounds = array<i64: 1, 8, 64>}, {pipeline_mode = #tpu.pipeline_mode<synchronous>, transform_indices = @transform_1, window_bounds = array<i64: 4, 64>}, {pipeline_mode = #tpu.pipeline_mode<synchronous>, transform_indices = @transform_2, window_bounds = array<i64: 1, 64>}, {pipeline_mode = #tpu.pipeline_mode<synchronous>, transform_indices = @transform_3, window_bounds = array<i64: 64, 32>}, {transform_indices = @transform_4, window_bounds = array<i64: 1, 8, 64>}, {transform_indices = @transform_5, window_bounds = array<i64: 1, 8, 32>}]} {
    %c0_i32 = arith.constant 0 : i32
    %0 = arith.cmpi eq, %arg1, %c0_i32 : i32
    %1 = arith.extui %0 : i1 to i32
    %c0_i32_0 = arith.constant 0 : i32
    %2 = arith.cmpi ne, %1, %c0_i32_0 : i32
    scf.if %2 {
      %cst_23 = arith.constant 0.000000e+00 : f32
      %45 = vector.broadcast %cst_23 : f32 to vector<8x64xf32>
      %c0_24 = arith.constant 0 : index
      %c0_25 = arith.constant 0 : index
      %46 = vector.load %arg8[%c0_24, %c0_25] : memref<8x64xf32, #tpu.memory_space<vmem>>, vector<8x64xf32>
      tpu.vector_store %arg8[%c0_24, %c0_25], %45 {strides = array<i32>} : memref<8x64xf32, #tpu.memory_space<vmem>>, vector<8x64xf32>,
    } else {
    }
    %c0 = arith.constant 0 : index
    %c0_1 = arith.constant 0 : index
    %c0_2 = arith.constant 0 : index
    %3 = vector.load %arg2[%c0, %c0_1, %c0_2] : memref<1x8x64xf32, #tpu.memory_space<vmem>>, vector<1x8x64xf32>
    %4 = vector.shape_cast %3 : vector<1x8x64xf32> to vector<8x64xf32>
    %c0_3 = arith.constant 0 : index
    %c0_4 = arith.constant 0 : index
    %5 = vector.load %arg8[%c0_3, %c0_4] : memref<8x64xf32, #tpu.memory_space<vmem>>, vector<8x64xf32>
    %6 = tpu.concatenate %5, %4 in 0 : vector<8x64xf32>, vector<8x64xf32> -> vector<16x64xf32>
    %7 = vector.extract_strided_slice %6 {offsets = [5, 0], sizes = [8, 64], strides = [1, 1]} : vector<16x64xf32> to vector<8x64xf32>
    %c0_5 = arith.constant 0 : index
    %c0_6 = arith.constant 0 : index
    %8 = vector.load %arg3[%c0_5, %c0_6] : memref<4x64xf32, #tpu.memory_space<vmem>>, vector<1x64xf32>
    %9 = vector.broadcast %8 : vector<1x64xf32> to vector<8x64xf32>
    %10 = arith.mulf %7, %9 : vector<8x64xf32>
    %11 = vector.extract_strided_slice %6 {offsets = [6, 0], sizes = [8, 64], strides = [1, 1]} : vector<16x64xf32> to vector<8x64xf32>
    %c1 = arith.constant 1 : index
    %c0_7 = arith.constant 0 : index
    %12 = vector.load %arg3[%c1, %c0_7] : memref<4x64xf32, #tpu.memory_space<vmem>>, vector<1x64xf32>
    %13 = vector.broadcast %12 : vector<1x64xf32> to vector<8x64xf32>
    %14 = arith.mulf %11, %13 : vector<8x64xf32>
    %15 = arith.addf %10, %14 : vector<8x64xf32>
    %16 = vector.extract_strided_slice %6 {offsets = [7, 0], sizes = [8, 64], strides = [1, 1]} : vector<16x64xf32> to vector<8x64xf32>
    %c2 = arith.constant 2 : index
    %c0_8 = arith.constant 0 : index
    %17 = vector.load %arg3[%c2, %c0_8] : memref<4x64xf32, #tpu.memory_space<vmem>>, vector<1x64xf32>
    %18 = vector.broadcast %17 : vector<1x64xf32> to vector<8x64xf32>
    %19 = arith.mulf %16, %18 : vector<8x64xf32>
    %20 = arith.addf %15, %19 : vector<8x64xf32>
    %21 = vector.extract_strided_slice %6 {offsets = [8, 0], sizes = [8, 64], strides = [1, 1]} : vector<16x64xf32> to vector<8x64xf32>
    %c3 = arith.constant 3 : index
    %c0_9 = arith.constant 0 : index
    %22 = vector.load %arg3[%c3, %c0_9] : memref<4x64xf32, #tpu.memory_space<vmem>>, vector<1x64xf32>
    %23 = vector.broadcast %22 : vector<1x64xf32> to vector<8x64xf32>
    %24 = arith.mulf %21, %23 : vector<8x64xf32>
    %25 = arith.addf %20, %24 : vector<8x64xf32>
    %c0_10 = arith.constant 0 : index
    %c0_11 = arith.constant 0 : index
    %26 = vector.load %arg4[%c0_10, %c0_11] : memref<1x64xf32, #tpu.memory_space<vmem>>, vector<1x64xf32>
    %27 = vector.broadcast %26 : vector<1x64xf32> to vector<8x64xf32>
    %28 = arith.addf %25, %27 : vector<8x64xf32>
    %c0_12 = arith.constant 0 : index
    %c0_13 = arith.constant 0 : index
    %29 = vector.load %arg8[%c0_12, %c0_13] : memref<8x64xf32, #tpu.memory_space<vmem>>, vector<8x64xf32>
    tpu.vector_store %arg8[%c0_12, %c0_13], %4 {strides = array<i32>} : memref<8x64xf32, #tpu.memory_space<vmem>>, vector<8x64xf32>,
    %30 = arith.negf %28 : vector<8x64xf32>
    %31 = math.exp %30 : vector<8x64xf32>
    %cst = arith.constant 1.000000e+00 : f32
    %32 = vector.broadcast %cst : f32 to vector<8x64xf32>
    %33 = arith.addf %32, %31 : vector<8x64xf32>
    %34 = arith.divf %32, %33 : vector<8x64xf32>
    %35 = arith.mulf %28, %34 : vector<8x64xf32>
    %c0_14 = arith.constant 0 : index
    %c0_15 = arith.constant 0 : index
    %c0_16 = arith.constant 0 : index
    %36 = vector.load %arg6[%c0_14, %c0_15, %c0_16] : memref<1x8x64xf32, #tpu.memory_space<vmem>>, vector<1x8x64xf32>
    %37 = vector.shape_cast %36 : vector<1x8x64xf32> to vector<8x64xf32>
    %38 = vector.shape_cast %35 : vector<8x64xf32> to vector<1x8x64xf32>
    tpu.vector_store %arg6[%c0_14, %c0_15, %c0_16], %38 {strides = array<i32>} : memref<1x8x64xf32, #tpu.memory_space<vmem>>, vector<1x8x64xf32>,
    %39 = arith.truncf %35 : vector<8x64xf32> to vector<8x64xbf16>
    %c0_17 = arith.constant 0 : index
    %c0_18 = arith.constant 0 : index
    %40 = vector.load %arg5[%c0_17, %c0_18] : memref<64x32xbf16, #tpu.memory_space<vmem>>, vector<64x32xbf16>
    %cst_19 = arith.constant dense<0.000000e+00> : vector<8x32xf32>
    %41 = tpu.matmul %39, %40, %cst_19 {dimension_numbers = #tpu.dot_dimension_numbers<[1], [0], [0], [1], [0, 0, 1, 1], [], []>} : vector<8x64xbf16>, vector<64x32xbf16>, vector<8x32xf32> -> vector<8x32xf32>
    %c0_20 = arith.constant 0 : index
    %c0_21 = arith.constant 0 : index
    %c0_22 = arith.constant 0 : index
    %42 = vector.load %arg7[%c0_20, %c0_21, %c0_22] : memref<1x8x32xf32, #tpu.memory_space<vmem>>, vector<1x8x32xf32>
    %43 = vector.shape_cast %42 : vector<1x8x32xf32> to vector<8x32xf32>
    %44 = vector.shape_cast %41 : vector<8x32xf32> to vector<1x8x32xf32>
    tpu.vector_store %arg7[%c0_20, %c0_21, %c0_22], %44 {strides = array<i32>} : memref<1x8x32xf32, #tpu.memory_space<vmem>>, vector<1x8x32xf32>,
    return
  }
  func.func @transform_0(%arg0: i32, %arg1: i32) -> (i32, i32, i32) {
    %c0_i32 = arith.constant 0 : i32
    %c0_i32_0 = arith.constant 0 : i32
    return %arg0, %arg1, %c0_i32 : i32, i32, i32
  }
  func.func @transform_1(%arg0: i32, %arg1: i32) -> (i32, i32) {
    %c0_i32 = arith.constant 0 : i32
    %c0_i32_0 = arith.constant 0 : i32
    %c0_i32_1 = arith.constant 0 : i32
    return %c0_i32, %c0_i32_0 : i32, i32
  }
  func.func @transform_2(%arg0: i32, %arg1: i32) -> (i32, i32) {
    %c0_i32 = arith.constant 0 : i32
    %c0_i32_0 = arith.constant 0 : i32
    %c0_i32_1 = arith.constant 0 : i32
    return %c0_i32, %c0_i32_0 : i32, i32
  }
  func.func @transform_3(%arg0: i32, %arg1: i32) -> (i32, i32) {
    %c0_i32 = arith.constant 0 : i32
    %c0_i32_0 = arith.constant 0 : i32
    %c0_i32_1 = arith.constant 0 : i32
    return %c0_i32, %c0_i32_0 : i32, i32
  }
  func.func @transform_4(%arg0: i32, %arg1: i32) -> (i32, i32, i32) {
    %c0_i32 = arith.constant 0 : i32
    %c0_i32_0 = arith.constant 0 : i32
    return %arg0, %arg1, %c0_i32 : i32, i32, i32
  }
  func.func @transform_5(%arg0: i32, %arg1: i32) -> (i32, i32, i32) {
    %c0_i32 = arith.constant 0 : i32
    %c0_i32_0 = arith.constant 0 : i32
    return %arg0, %arg1, %c0_i32 : i32, i32, i32
  }
}

module attributes {stable_mosaic.version = 11 : i64} {
  func.func @_ln_inproj_kernel(%arg0: i32, %arg1: memref<32x32xf32, #tpu.memory_space<vmem>>, %arg2: memref<1x32xf32, #tpu.memory_space<vmem>>, %arg3: memref<1x32xf32, #tpu.memory_space<vmem>>, %arg4: memref<32x64xbf16, #tpu.memory_space<vmem>>, %arg5: memref<32x64xbf16, #tpu.memory_space<vmem>>, %arg6: memref<32x64xf32, #tpu.memory_space<vmem>>, %arg7: memref<32x64xf32, #tpu.memory_space<vmem>>) attributes {dimension_semantics = [#tpu.dimension_semantics<parallel>], iteration_bounds = array<i64: 1>, scalar_prefetch = 0 : i64, scratch_operands = 0 : i64, tpu.core_type = #tpu.core_type<tc>, window_params = [{transform_indices = @transform_0, window_bounds = array<i64: 32, 32>}, {pipeline_mode = #tpu.pipeline_mode<synchronous>, transform_indices = @transform_1, window_bounds = array<i64: 1, 32>}, {pipeline_mode = #tpu.pipeline_mode<synchronous>, transform_indices = @transform_2, window_bounds = array<i64: 1, 32>}, {pipeline_mode = #tpu.pipeline_mode<synchronous>, transform_indices = @transform_3, window_bounds = array<i64: 32, 64>}, {pipeline_mode = #tpu.pipeline_mode<synchronous>, transform_indices = @transform_4, window_bounds = array<i64: 32, 64>}, {transform_indices = @transform_5, window_bounds = array<i64: 32, 64>}, {transform_indices = @transform_6, window_bounds = array<i64: 32, 64>}]} {
    %c0 = arith.constant 0 : index
    %c0_0 = arith.constant 0 : index
    %0 = vector.load %arg1[%c0, %c0_0] : memref<32x32xf32, #tpu.memory_space<vmem>>, vector<32x32xf32>
    %cst = arith.constant dense<0.000000e+00> : vector<32xf32>
    %1 = vector.multi_reduction <add>, %0, %cst [1] : vector<32x32xf32> to vector<32xf32>
    %2 = vector.shape_cast %1 : vector<32xf32> to vector<32x1xf32>
    %cst_1 = arith.constant 3.200000e+01 : f32
    %3 = vector.broadcast %cst_1 : f32 to vector<32x1xf32>
    %4 = arith.divf %2, %3 : vector<32x1xf32>
    %5 = vector.broadcast %4 : vector<32x1xf32> to vector<32x32xf32>
    %6 = arith.subf %0, %5 : vector<32x32xf32>
    %7 = arith.mulf %6, %6 : vector<32x32xf32>
    %cst_2 = arith.constant dense<0.000000e+00> : vector<32xf32>
    %8 = vector.multi_reduction <add>, %7, %cst_2 [1] : vector<32x32xf32> to vector<32xf32>
    %9 = vector.shape_cast %8 : vector<32xf32> to vector<32x1xf32>
    %cst_3 = arith.constant 3.200000e+01 : f32
    %10 = vector.broadcast %cst_3 : f32 to vector<32x1xf32>
    %11 = arith.divf %9, %10 : vector<32x1xf32>
    %cst_4 = arith.constant 9.99999974E-6 : f32
    %12 = vector.broadcast %cst_4 : f32 to vector<32x1xf32>
    %13 = arith.addf %11, %12 : vector<32x1xf32>
    %14 = math.rsqrt %13 : vector<32x1xf32>
    %15 = vector.broadcast %14 : vector<32x1xf32> to vector<32x32xf32>
    %16 = arith.mulf %6, %15 : vector<32x32xf32>
    %c0_5 = arith.constant 0 : index
    %c0_6 = arith.constant 0 : index
    %17 = vector.load %arg2[%c0_5, %c0_6] : memref<1x32xf32, #tpu.memory_space<vmem>>, vector<1x32xf32>
    %18 = vector.broadcast %17 : vector<1x32xf32> to vector<32x32xf32>
    %19 = arith.mulf %16, %18 : vector<32x32xf32>
    %c0_7 = arith.constant 0 : index
    %c0_8 = arith.constant 0 : index
    %20 = vector.load %arg3[%c0_7, %c0_8] : memref<1x32xf32, #tpu.memory_space<vmem>>, vector<1x32xf32>
    %21 = vector.broadcast %20 : vector<1x32xf32> to vector<32x32xf32>
    %22 = arith.addf %19, %21 : vector<32x32xf32>
    %23 = arith.truncf %22 : vector<32x32xf32> to vector<32x32xbf16>
    %c0_9 = arith.constant 0 : index
    %c0_10 = arith.constant 0 : index
    %24 = vector.load %arg4[%c0_9, %c0_10] : memref<32x64xbf16, #tpu.memory_space<vmem>>, vector<32x64xbf16>
    %cst_11 = arith.constant dense<0.000000e+00> : vector<32x64xf32>
    %25 = tpu.matmul %23, %24, %cst_11 {dimension_numbers = #tpu.dot_dimension_numbers<[1], [0], [0], [1], [0, 0, 1, 1], [], []>} : vector<32x32xbf16>, vector<32x64xbf16>, vector<32x64xf32> -> vector<32x64xf32>
    %c0_12 = arith.constant 0 : index
    %c0_13 = arith.constant 0 : index
    %26 = vector.load %arg6[%c0_12, %c0_13] : memref<32x64xf32, #tpu.memory_space<vmem>>, vector<32x64xf32>
    tpu.vector_store %arg6[%c0_12, %c0_13], %25 {strides = array<i32>} : memref<32x64xf32, #tpu.memory_space<vmem>>, vector<32x64xf32>,
    %c0_14 = arith.constant 0 : index
    %c0_15 = arith.constant 0 : index
    %27 = vector.load %arg5[%c0_14, %c0_15] : memref<32x64xbf16, #tpu.memory_space<vmem>>, vector<32x64xbf16>
    %cst_16 = arith.constant dense<0.000000e+00> : vector<32x64xf32>
    %28 = tpu.matmul %23, %27, %cst_16 {dimension_numbers = #tpu.dot_dimension_numbers<[1], [0], [0], [1], [0, 0, 1, 1], [], []>} : vector<32x32xbf16>, vector<32x64xbf16>, vector<32x64xf32> -> vector<32x64xf32>
    %c0_17 = arith.constant 0 : index
    %c0_18 = arith.constant 0 : index
    %29 = vector.load %arg7[%c0_17, %c0_18] : memref<32x64xf32, #tpu.memory_space<vmem>>, vector<32x64xf32>
    tpu.vector_store %arg7[%c0_17, %c0_18], %28 {strides = array<i32>} : memref<32x64xf32, #tpu.memory_space<vmem>>, vector<32x64xf32>,
    return
  }
  func.func @transform_0(%arg0: i32) -> (i32, i32) {
    %c0_i32 = arith.constant 0 : i32
    %c0_i32_0 = arith.constant 0 : i32
    return %arg0, %c0_i32 : i32, i32
  }
  func.func @transform_1(%arg0: i32) -> (i32, i32) {
    %c0_i32 = arith.constant 0 : i32
    %c0_i32_0 = arith.constant 0 : i32
    %c0_i32_1 = arith.constant 0 : i32
    return %c0_i32, %c0_i32_0 : i32, i32
  }
  func.func @transform_2(%arg0: i32) -> (i32, i32) {
    %c0_i32 = arith.constant 0 : i32
    %c0_i32_0 = arith.constant 0 : i32
    %c0_i32_1 = arith.constant 0 : i32
    return %c0_i32, %c0_i32_0 : i32, i32
  }
  func.func @transform_3(%arg0: i32) -> (i32, i32) {
    %c0_i32 = arith.constant 0 : i32
    %c0_i32_0 = arith.constant 0 : i32
    %c0_i32_1 = arith.constant 0 : i32
    return %c0_i32, %c0_i32_0 : i32, i32
  }
  func.func @transform_4(%arg0: i32) -> (i32, i32) {
    %c0_i32 = arith.constant 0 : i32
    %c0_i32_0 = arith.constant 0 : i32
    %c0_i32_1 = arith.constant 0 : i32
    return %c0_i32, %c0_i32_0 : i32, i32
  }
  func.func @transform_5(%arg0: i32) -> (i32, i32) {
    %c0_i32 = arith.constant 0 : i32
    %c0_i32_0 = arith.constant 0 : i32
    return %arg0, %c0_i32 : i32, i32
  }
  func.func @transform_6(%arg0: i32) -> (i32, i32) {
    %c0_i32 = arith.constant 0 : i32
    %c0_i32_0 = arith.constant 0 : i32
    return %arg0, %c0_i32 : i32, i32
  }
}

module attributes {stable_mosaic.version = 11 : i64} {
  func.func @_dt_scan_gate_outproj_kernel(%arg0: i32, %arg1: i32, %arg2: memref<1x8x64xf32, #tpu.memory_space<vmem>>, %arg3: memref<1x8x64xf32, #tpu.memory_space<vmem>>, %arg4: memref<1x1x32x8xf32, #tpu.memory_space<vmem>>, %arg5: memref<64x2xbf16, #tpu.memory_space<vmem>>, %arg6: memref<2x64xbf16, #tpu.memory_space<vmem>>, %arg7: memref<1x64xf32, #tpu.memory_space<vmem>>, %arg8: memref<16x64xf32, #tpu.memory_space<vmem>>, %arg9: memref<1x64xf32, #tpu.memory_space<vmem>>, %arg10: memref<64x32xbf16, #tpu.memory_space<vmem>>, %arg11: memref<1x8x32xf32, #tpu.memory_space<vmem>>, %arg12: memref<16x64xf32, #tpu.memory_space<vmem>>) attributes {dimension_semantics = [#tpu.dimension_semantics<parallel>, #tpu.dimension_semantics<arbitrary>], iteration_bounds = array<i64: 2, 2>, scalar_prefetch = 0 : i64, scratch_operands = 1 : i64, tpu.core_type = #tpu.core_type<tc>, window_params = [{transform_indices = @transform_0, window_bounds = array<i64: 1, 8, 64>}, {transform_indices = @transform_1, window_bounds = array<i64: 1, 8, 64>}, {transform_indices = @transform_2, window_bounds = array<i64: 1, 1, 32, 8>}, {pipeline_mode = #tpu.pipeline_mode<synchronous>, transform_indices = @transform_3, window_bounds = array<i64: 64, 2>}, {pipeline_mode = #tpu.pipeline_mode<synchronous>, transform_indices = @transform_4, window_bounds = array<i64: 2, 64>}, {pipeline_mode = #tpu.pipeline_mode<synchronous>, transform_indices = @transform_5, window_bounds = array<i64: 1, 64>}, {pipeline_mode = #tpu.pipeline_mode<synchronous>, transform_indices = @transform_6, window_bounds = array<i64: 16, 64>}, {pipeline_mode = #tpu.pipeline_mode<synchronous>, transform_indices = @transform_7, window_bounds = array<i64: 1, 64>}, {pipeline_mode = #tpu.pipeline_mode<synchronous>, transform_indices = @transform_8, window_bounds = array<i64: 64, 32>}, {transform_indices = @transform_9, window_bounds = array<i64: 1, 8, 32>}]} {
    %c0_i32 = arith.constant 0 : i32
    %0 = arith.cmpi eq, %arg1, %c0_i32 : i32
    %1 = arith.extui %0 : i1 to i32
    %c0_i32_0 = arith.constant 0 : i32
    %2 = arith.cmpi ne, %1, %c0_i32_0 : i32
    scf.if %2 {
      %cst_42 = arith.constant 0.000000e+00 : f32
      %182 = vector.broadcast %cst_42 : f32 to vector<16x64xf32>
      %c0_43 = arith.constant 0 : index
      %c0_44 = arith.constant 0 : index
      %183 = vector.load %arg12[%c0_43, %c0_44] : memref<16x64xf32, #tpu.memory_space<vmem>>, vector<16x64xf32>
      tpu.vector_store %arg12[%c0_43, %c0_44], %182 {strides = array<i32>} : memref<16x64xf32, #tpu.memory_space<vmem>>, vector<16x64xf32>,
    } else {
    }
    %c0 = arith.constant 0 : index
    %c0_1 = arith.constant 0 : index
    %c0_2 = arith.constant 0 : index
    %3 = vector.load %arg2[%c0, %c0_1, %c0_2] : memref<1x8x64xf32, #tpu.memory_space<vmem>>, vector<1x8x64xf32>
    %4 = vector.shape_cast %3 : vector<1x8x64xf32> to vector<8x64xf32>
    %c0_3 = arith.constant 0 : index
    %c0_4 = arith.constant 0 : index
    %c0_5 = arith.constant 0 : index
    %5 = vector.load %arg3[%c0_3, %c0_4, %c0_5] : memref<1x8x64xf32, #tpu.memory_space<vmem>>, vector<1x8x64xf32>
    %6 = vector.shape_cast %5 : vector<1x8x64xf32> to vector<8x64xf32>
    %c0_6 = arith.constant 0 : index
    %c0_7 = arith.constant 0 : index
    %c0_8 = arith.constant 0 : index
    %c0_9 = arith.constant 0 : index
    %7 = vector.load %arg4[%c0_6, %c0_7, %c0_8, %c0_9] : memref<1x1x32x8xf32, #tpu.memory_space<vmem>>, vector<1x1x32x8xf32>
    %8 = vector.shape_cast %7 : vector<1x1x32x8xf32> to vector<32x8xf32>
    %9 = arith.truncf %4 : vector<8x64xf32> to vector<8x64xbf16>
    %c0_10 = arith.constant 0 : index
    %c0_11 = arith.constant 0 : index
    %10 = vector.load %arg5[%c0_10, %c0_11] : memref<64x2xbf16, #tpu.memory_space<vmem>>, vector<64x2xbf16>
    %cst = arith.constant dense<0.000000e+00> : vector<8x2xf32>
    %11 = tpu.matmul %9, %10, %cst {dimension_numbers = #tpu.dot_dimension_numbers<[1], [0], [0], [1], [0, 0, 1, 1], [], []>} : vector<8x64xbf16>, vector<64x2xbf16>, vector<8x2xf32> -> vector<8x2xf32>
    %12 = arith.truncf %11 : vector<8x2xf32> to vector<8x2xbf16>
    %c0_12 = arith.constant 0 : index
    %c0_13 = arith.constant 0 : index
    %13 = vector.load %arg6[%c0_12, %c0_13] : memref<2x64xbf16, #tpu.memory_space<vmem>>, vector<2x64xbf16>
    %cst_14 = arith.constant dense<0.000000e+00> : vector<8x64xf32>
    %14 = tpu.matmul %12, %13, %cst_14 {dimension_numbers = #tpu.dot_dimension_numbers<[1], [0], [0], [1], [0, 0, 1, 1], [], []>} : vector<8x2xbf16>, vector<2x64xbf16>, vector<8x64xf32> -> vector<8x64xf32>
    %c0_15 = arith.constant 0 : index
    %c0_16 = arith.constant 0 : index
    %15 = vector.load %arg7[%c0_15, %c0_16] : memref<1x64xf32, #tpu.memory_space<vmem>>, vector<1x64xf32>
    %16 = vector.broadcast %15 : vector<1x64xf32> to vector<8x64xf32>
    %17 = arith.addf %14, %16 : vector<8x64xf32>
    %cst_17 = arith.constant 0.000000e+00 : f32
    %18 = vector.broadcast %cst_17 : f32 to vector<8x64xf32>
    %19 = arith.maximumf %17, %18 : vector<8x64xf32>
    %20 = vector.broadcast %cst_17 : f32 to vector<8x64xf32>
    %21 = arith.subf %17, %20 : vector<8x64xf32>
    %22 = arith.cmpf one, %21, %21 : vector<8x64xf32>
    %23 = vector.broadcast %cst_17 : f32 to vector<8x64xf32>
    %24 = arith.addf %17, %23 : vector<8x64xf32>
    %25 = math.absf %21 : vector<8x64xf32>
    %cst_18 = arith.constant 0.000000e+00 : f32
    %26 = vector.broadcast %cst_18 : f32 to vector<8x64xf32>
    %27 = arith.subf %26, %25 : vector<8x64xf32>
    %28 = math.exp %27 : vector<8x64xf32>
    %29 = math.log1p %28 : vector<8x64xf32>
    %30 = arith.addf %19, %29 : vector<8x64xf32>
    %31 = arith.select %22, %24, %30 : vector<8x64xi1>, vector<8x64xf32>
    %32 = arith.mulf %31, %4 : vector<8x64xf32>
    %33 = arith.negf %6 : vector<8x64xf32>
    %34 = math.exp %33 : vector<8x64xf32>
    %cst_19 = arith.constant 1.000000e+00 : f32
    %35 = vector.broadcast %cst_19 : f32 to vector<8x64xf32>
    %36 = arith.addf %35, %34 : vector<8x64xf32>
    %37 = arith.divf %35, %36 : vector<8x64xf32>
    %38 = arith.mulf %6, %37 : vector<8x64xf32>
    %c0_20 = arith.constant 0 : index
    %c0_21 = arith.constant 0 : index
    %39 = vector.load %arg8[%c0_20, %c0_21] : memref<16x64xf32, #tpu.memory_space<vmem>>, vector<16x64xf32>
    %c0_22 = arith.constant 0 : index
    %c0_23 = arith.constant 0 : index
    %40 = vector.load %arg12[%c0_22, %c0_23] : memref<16x64xf32, #tpu.memory_space<vmem>>, vector<16x64xf32>
    %41 = vector.extract_strided_slice %31 {offsets = [0, 0], sizes = [1, 64], strides = [1, 1]} : vector<8x64xf32> to vector<1x64xf32>
    %42 = vector.broadcast %41 : vector<1x64xf32> to vector<16x64xf32>
    %43 = arith.mulf %42, %39 : vector<16x64xf32>
    %44 = math.exp %43 : vector<16x64xf32>
    %45 = vector.extract_strided_slice %8 {offsets = [0, 0], sizes = [16, 1], strides = [1, 1]} : vector<32x8xf32> to vector<16x1xf32>
    %46 = vector.extract_strided_slice %8 {offsets = [16, 0], sizes = [16, 1], strides = [1, 1]} : vector<32x8xf32> to vector<16x1xf32>
    %47 = arith.mulf %44, %40 : vector<16x64xf32>
    %48 = vector.extract_strided_slice %32 {offsets = [0, 0], sizes = [1, 64], strides = [1, 1]} : vector<8x64xf32> to vector<1x64xf32>
    %49 = vector.broadcast %45 : vector<16x1xf32> to vector<16x64xf32>
    %50 = vector.broadcast %48 : vector<1x64xf32> to vector<16x64xf32>
    %51 = arith.mulf %49, %50 : vector<16x64xf32>
    %52 = arith.addf %47, %51 : vector<16x64xf32>
    %53 = vector.broadcast %46 : vector<16x1xf32> to vector<16x64xf32>
    %54 = arith.mulf %52, %53 : vector<16x64xf32>
    %cst_24 = arith.constant dense<0.000000e+00> : vector<64xf32>
    %55 = vector.multi_reduction <add>, %54, %cst_24 [0] : vector<16x64xf32> to vector<64xf32>
    %56 = vector.shape_cast %55 : vector<64xf32> to vector<1x64xf32>
    %57 = vector.extract_strided_slice %31 {offsets = [1, 0], sizes = [1, 64], strides = [1, 1]} : vector<8x64xf32> to vector<1x64xf32>
    %58 = vector.broadcast %57 : vector<1x64xf32> to vector<16x64xf32>
    %59 = arith.mulf %58, %39 : vector<16x64xf32>
    %60 = math.exp %59 : vector<16x64xf32>
    %61 = vector.extract_strided_slice %8 {offsets = [0, 1], sizes = [16, 1], strides = [1, 1]} : vector<32x8xf32> to vector<16x1xf32>
    %62 = vector.extract_strided_slice %8 {offsets = [16, 1], sizes = [16, 1], strides = [1, 1]} : vector<32x8xf32> to vector<16x1xf32>
    %63 = arith.mulf %60, %52 : vector<16x64xf32>
    %64 = vector.extract_strided_slice %32 {offsets = [1, 0], sizes = [1, 64], strides = [1, 1]} : vector<8x64xf32> to vector<1x64xf32>
    %65 = vector.broadcast %61 : vector<16x1xf32> to vector<16x64xf32>
    %66 = vector.broadcast %64 : vector<1x64xf32> to vector<16x64xf32>
    %67 = arith.mulf %65, %66 : vector<16x64xf32>
    %68 = arith.addf %63, %67 : vector<16x64xf32>
    %69 = vector.broadcast %62 : vector<16x1xf32> to vector<16x64xf32>
    %70 = arith.mulf %68, %69 : vector<16x64xf32>
    %cst_25 = arith.constant dense<0.000000e+00> : vector<64xf32>
    %71 = vector.multi_reduction <add>, %70, %cst_25 [0] : vector<16x64xf32> to vector<64xf32>
    %72 = vector.shape_cast %71 : vector<64xf32> to vector<1x64xf32>
    %73 = vector.extract_strided_slice %31 {offsets = [2, 0], sizes = [1, 64], strides = [1, 1]} : vector<8x64xf32> to vector<1x64xf32>
    %74 = vector.broadcast %73 : vector<1x64xf32> to vector<16x64xf32>
    %75 = arith.mulf %74, %39 : vector<16x64xf32>
    %76 = math.exp %75 : vector<16x64xf32>
    %77 = vector.extract_strided_slice %8 {offsets = [0, 2], sizes = [16, 1], strides = [1, 1]} : vector<32x8xf32> to vector<16x1xf32>
    %78 = vector.extract_strided_slice %8 {offsets = [16, 2], sizes = [16, 1], strides = [1, 1]} : vector<32x8xf32> to vector<16x1xf32>
    %79 = arith.mulf %76, %68 : vector<16x64xf32>
    %80 = vector.extract_strided_slice %32 {offsets = [2, 0], sizes = [1, 64], strides = [1, 1]} : vector<8x64xf32> to vector<1x64xf32>
    %81 = vector.broadcast %77 : vector<16x1xf32> to vector<16x64xf32>
    %82 = vector.broadcast %80 : vector<1x64xf32> to vector<16x64xf32>
    %83 = arith.mulf %81, %82 : vector<16x64xf32>
    %84 = arith.addf %79, %83 : vector<16x64xf32>
    %85 = vector.broadcast %78 : vector<16x1xf32> to vector<16x64xf32>
    %86 = arith.mulf %84, %85 : vector<16x64xf32>
    %cst_26 = arith.constant dense<0.000000e+00> : vector<64xf32>
    %87 = vector.multi_reduction <add>, %86, %cst_26 [0] : vector<16x64xf32> to vector<64xf32>
    %88 = vector.shape_cast %87 : vector<64xf32> to vector<1x64xf32>
    %89 = vector.extract_strided_slice %31 {offsets = [3, 0], sizes = [1, 64], strides = [1, 1]} : vector<8x64xf32> to vector<1x64xf32>
    %90 = vector.broadcast %89 : vector<1x64xf32> to vector<16x64xf32>
    %91 = arith.mulf %90, %39 : vector<16x64xf32>
    %92 = math.exp %91 : vector<16x64xf32>
    %93 = vector.extract_strided_slice %8 {offsets = [0, 3], sizes = [16, 1], strides = [1, 1]} : vector<32x8xf32> to vector<16x1xf32>
    %94 = vector.extract_strided_slice %8 {offsets = [16, 3], sizes = [16, 1], strides = [1, 1]} : vector<32x8xf32> to vector<16x1xf32>
    %95 = arith.mulf %92, %84 : vector<16x64xf32>
    %96 = vector.extract_strided_slice %32 {offsets = [3, 0], sizes = [1, 64], strides = [1, 1]} : vector<8x64xf32> to vector<1x64xf32>
    %97 = vector.broadcast %93 : vector<16x1xf32> to vector<16x64xf32>
    %98 = vector.broadcast %96 : vector<1x64xf32> to vector<16x64xf32>
    %99 = arith.mulf %97, %98 : vector<16x64xf32>
    %100 = arith.addf %95, %99 : vector<16x64xf32>
    %101 = vector.broadcast %94 : vector<16x1xf32> to vector<16x64xf32>
    %102 = arith.mulf %100, %101 : vector<16x64xf32>
    %cst_27 = arith.constant dense<0.000000e+00> : vector<64xf32>
    %103 = vector.multi_reduction <add>, %102, %cst_27 [0] : vector<16x64xf32> to vector<64xf32>
    %104 = vector.shape_cast %103 : vector<64xf32> to vector<1x64xf32>
    %105 = vector.extract_strided_slice %31 {offsets = [4, 0], sizes = [1, 64], strides = [1, 1]} : vector<8x64xf32> to vector<1x64xf32>
    %106 = vector.broadcast %105 : vector<1x64xf32> to vector<16x64xf32>
    %107 = arith.mulf %106, %39 : vector<16x64xf32>
    %108 = math.exp %107 : vector<16x64xf32>
    %109 = vector.extract_strided_slice %8 {offsets = [0, 4], sizes = [16, 1], strides = [1, 1]} : vector<32x8xf32> to vector<16x1xf32>
    %110 = vector.extract_strided_slice %8 {offsets = [16, 4], sizes = [16, 1], strides = [1, 1]} : vector<32x8xf32> to vector<16x1xf32>
    %111 = arith.mulf %108, %100 : vector<16x64xf32>
    %112 = vector.extract_strided_slice %32 {offsets = [4, 0], sizes = [1, 64], strides = [1, 1]} : vector<8x64xf32> to vector<1x64xf32>
    %113 = vector.broadcast %109 : vector<16x1xf32> to vector<16x64xf32>
    %114 = vector.broadcast %112 : vector<1x64xf32> to vector<16x64xf32>
    %115 = arith.mulf %113, %114 : vector<16x64xf32>
    %116 = arith.addf %111, %115 : vector<16x64xf32>
    %117 = vector.broadcast %110 : vector<16x1xf32> to vector<16x64xf32>
    %118 = arith.mulf %116, %117 : vector<16x64xf32>
    %cst_28 = arith.constant dense<0.000000e+00> : vector<64xf32>
    %119 = vector.multi_reduction <add>, %118, %cst_28 [0] : vector<16x64xf32> to vector<64xf32>
    %120 = vector.shape_cast %119 : vector<64xf32> to vector<1x64xf32>
    %121 = vector.extract_strided_slice %31 {offsets = [5, 0], sizes = [1, 64], strides = [1, 1]} : vector<8x64xf32> to vector<1x64xf32>
    %122 = vector.broadcast %121 : vector<1x64xf32> to vector<16x64xf32>
    %123 = arith.mulf %122, %39 : vector<16x64xf32>
    %124 = math.exp %123 : vector<16x64xf32>
    %125 = vector.extract_strided_slice %8 {offsets = [0, 5], sizes = [16, 1], strides = [1, 1]} : vector<32x8xf32> to vector<16x1xf32>
    %126 = vector.extract_strided_slice %8 {offsets = [16, 5], sizes = [16, 1], strides = [1, 1]} : vector<32x8xf32> to vector<16x1xf32>
    %127 = arith.mulf %124, %116 : vector<16x64xf32>
    %128 = vector.extract_strided_slice %32 {offsets = [5, 0], sizes = [1, 64], strides = [1, 1]} : vector<8x64xf32> to vector<1x64xf32>
    %129 = vector.broadcast %125 : vector<16x1xf32> to vector<16x64xf32>
    %130 = vector.broadcast %128 : vector<1x64xf32> to vector<16x64xf32>
    %131 = arith.mulf %129, %130 : vector<16x64xf32>
    %132 = arith.addf %127, %131 : vector<16x64xf32>
    %133 = vector.broadcast %126 : vector<16x1xf32> to vector<16x64xf32>
    %134 = arith.mulf %132, %133 : vector<16x64xf32>
    %cst_29 = arith.constant dense<0.000000e+00> : vector<64xf32>
    %135 = vector.multi_reduction <add>, %134, %cst_29 [0] : vector<16x64xf32> to vector<64xf32>
    %136 = vector.shape_cast %135 : vector<64xf32> to vector<1x64xf32>
    %137 = vector.extract_strided_slice %31 {offsets = [6, 0], sizes = [1, 64], strides = [1, 1]} : vector<8x64xf32> to vector<1x64xf32>
    %138 = vector.broadcast %137 : vector<1x64xf32> to vector<16x64xf32>
    %139 = arith.mulf %138, %39 : vector<16x64xf32>
    %140 = math.exp %139 : vector<16x64xf32>
    %141 = vector.extract_strided_slice %8 {offsets = [0, 6], sizes = [16, 1], strides = [1, 1]} : vector<32x8xf32> to vector<16x1xf32>
    %142 = vector.extract_strided_slice %8 {offsets = [16, 6], sizes = [16, 1], strides = [1, 1]} : vector<32x8xf32> to vector<16x1xf32>
    %143 = arith.mulf %140, %132 : vector<16x64xf32>
    %144 = vector.extract_strided_slice %32 {offsets = [6, 0], sizes = [1, 64], strides = [1, 1]} : vector<8x64xf32> to vector<1x64xf32>
    %145 = vector.broadcast %141 : vector<16x1xf32> to vector<16x64xf32>
    %146 = vector.broadcast %144 : vector<1x64xf32> to vector<16x64xf32>
    %147 = arith.mulf %145, %146 : vector<16x64xf32>
    %148 = arith.addf %143, %147 : vector<16x64xf32>
    %149 = vector.broadcast %142 : vector<16x1xf32> to vector<16x64xf32>
    %150 = arith.mulf %148, %149 : vector<16x64xf32>
    %cst_30 = arith.constant dense<0.000000e+00> : vector<64xf32>
    %151 = vector.multi_reduction <add>, %150, %cst_30 [0] : vector<16x64xf32> to vector<64xf32>
    %152 = vector.shape_cast %151 : vector<64xf32> to vector<1x64xf32>
    %153 = vector.extract_strided_slice %31 {offsets = [7, 0], sizes = [1, 64], strides = [1, 1]} : vector<8x64xf32> to vector<1x64xf32>
    %154 = vector.broadcast %153 : vector<1x64xf32> to vector<16x64xf32>
    %155 = arith.mulf %154, %39 : vector<16x64xf32>
    %156 = math.exp %155 : vector<16x64xf32>
    %157 = vector.extract_strided_slice %8 {offsets = [0, 7], sizes = [16, 1], strides = [1, 1]} : vector<32x8xf32> to vector<16x1xf32>
    %158 = vector.extract_strided_slice %8 {offsets = [16, 7], sizes = [16, 1], strides = [1, 1]} : vector<32x8xf32> to vector<16x1xf32>
    %159 = arith.mulf %156, %148 : vector<16x64xf32>
    %160 = vector.extract_strided_slice %32 {offsets = [7, 0], sizes = [1, 64], strides = [1, 1]} : vector<8x64xf32> to vector<1x64xf32>
    %161 = vector.broadcast %157 : vector<16x1xf32> to vector<16x64xf32>
    %162 = vector.broadcast %160 : vector<1x64xf32> to vector<16x64xf32>
    %163 = arith.mulf %161, %162 : vector<16x64xf32>
    %164 = arith.addf %159, %163 : vector<16x64xf32>
    %165 = vector.broadcast %158 : vector<16x1xf32> to vector<16x64xf32>
    %166 = arith.mulf %164, %165 : vector<16x64xf32>
    %cst_31 = arith.constant dense<0.000000e+00> : vector<64xf32>
    %167 = vector.multi_reduction <add>, %166, %cst_31 [0] : vector<16x64xf32> to vector<64xf32>
    %168 = vector.shape_cast %167 : vector<64xf32> to vector<1x64xf32>
    %c0_32 = arith.constant 0 : index
    %c0_33 = arith.constant 0 : index
    %169 = vector.load %arg12[%c0_32, %c0_33] : memref<16x64xf32, #tpu.memory_space<vmem>>, vector<16x64xf32>
    tpu.vector_store %arg12[%c0_32, %c0_33], %164 {strides = array<i32>} : memref<16x64xf32, #tpu.memory_space<vmem>>, vector<16x64xf32>,
    %170 = tpu.concatenate %56, %72, %88, %104, %120, %136, %152, %168 in 0 : vector<1x64xf32>, vector<1x64xf32>, vector<1x64xf32>, vector<1x64xf32>, vector<1x64xf32>, vector<1x64xf32>, vector<1x64xf32>, vector<1x64xf32> -> vector<8x64xf32>
    %c0_34 = arith.constant 0 : index
    %c0_35 = arith.constant 0 : index
    %171 = vector.load %arg9[%c0_34, %c0_35] : memref<1x64xf32, #tpu.memory_space<vmem>>, vector<1x64xf32>
    %172 = vector.broadcast %171 : vector<1x64xf32> to vector<8x64xf32>
    %173 = arith.mulf %172, %4 : vector<8x64xf32>
    %174 = arith.addf %170, %173 : vector<8x64xf32>
    %175 = arith.mulf %174, %38 : vector<8x64xf32>
    %176 = arith.truncf %175 : vector<8x64xf32> to vector<8x64xbf16>
    %c0_36 = arith.constant 0 : index
    %c0_37 = arith.constant 0 : index
    %177 = vector.load %arg10[%c0_36, %c0_37] : memref<64x32xbf16, #tpu.memory_space<vmem>>, vector<64x32xbf16>
    %cst_38 = arith.constant dense<0.000000e+00> : vector<8x32xf32>
    %178 = tpu.matmul %176, %177, %cst_38 {dimension_numbers = #tpu.dot_dimension_numbers<[1], [0], [0], [1], [0, 0, 1, 1], [], []>} : vector<8x64xbf16>, vector<64x32xbf16>, vector<8x32xf32> -> vector<8x32xf32>
    %c0_39 = arith.constant 0 : index
    %c0_40 = arith.constant 0 : index
    %c0_41 = arith.constant 0 : index
    %179 = vector.load %arg11[%c0_39, %c0_40, %c0_41] : memref<1x8x32xf32, #tpu.memory_space<vmem>>, vector<1x8x32xf32>
    %180 = vector.shape_cast %179 : vector<1x8x32xf32> to vector<8x32xf32>
    %181 = vector.shape_cast %178 : vector<8x32xf32> to vector<1x8x32xf32>
    tpu.vector_store %arg11[%c0_39, %c0_40, %c0_41], %181 {strides = array<i32>} : memref<1x8x32xf32, #tpu.memory_space<vmem>>, vector<1x8x32xf32>,
    return
  }
  func.func @transform_0(%arg0: i32, %arg1: i32) -> (i32, i32, i32) {
    %c0_i32 = arith.constant 0 : i32
    %c0_i32_0 = arith.constant 0 : i32
    return %arg0, %arg1, %c0_i32 : i32, i32, i32
  }
  func.func @transform_1(%arg0: i32, %arg1: i32) -> (i32, i32, i32) {
    %c0_i32 = arith.constant 0 : i32
    %c0_i32_0 = arith.constant 0 : i32
    return %arg0, %arg1, %c0_i32 : i32, i32, i32
  }
  func.func @transform_2(%arg0: i32, %arg1: i32) -> (i32, i32, i32, i32) {
    %c0_i32 = arith.constant 0 : i32
    %c0_i32_0 = arith.constant 0 : i32
    %c0_i32_1 = arith.constant 0 : i32
    return %arg0, %arg1, %c0_i32, %c0_i32_0 : i32, i32, i32, i32
  }
  func.func @transform_3(%arg0: i32, %arg1: i32) -> (i32, i32) {
    %c0_i32 = arith.constant 0 : i32
    %c0_i32_0 = arith.constant 0 : i32
    %c0_i32_1 = arith.constant 0 : i32
    return %c0_i32, %c0_i32_0 : i32, i32
  }
  func.func @transform_4(%arg0: i32, %arg1: i32) -> (i32, i32) {
    %c0_i32 = arith.constant 0 : i32
    %c0_i32_0 = arith.constant 0 : i32
    %c0_i32_1 = arith.constant 0 : i32
    return %c0_i32, %c0_i32_0 : i32, i32
  }
  func.func @transform_5(%arg0: i32, %arg1: i32) -> (i32, i32) {
    %c0_i32 = arith.constant 0 : i32
    %c0_i32_0 = arith.constant 0 : i32
    %c0_i32_1 = arith.constant 0 : i32
    return %c0_i32, %c0_i32_0 : i32, i32
  }
  func.func @transform_6(%arg0: i32, %arg1: i32) -> (i32, i32) {
    %c0_i32 = arith.constant 0 : i32
    %c0_i32_0 = arith.constant 0 : i32
    %c0_i32_1 = arith.constant 0 : i32
    return %c0_i32, %c0_i32_0 : i32, i32
  }
  func.func @transform_7(%arg0: i32, %arg1: i32) -> (i32, i32) {
    %c0_i32 = arith.constant 0 : i32
    %c0_i32_0 = arith.constant 0 : i32
    %c0_i32_1 = arith.constant 0 : i32
    return %c0_i32, %c0_i32_0 : i32, i32
  }
  func.func @transform_8(%arg0: i32, %arg1: i32) -> (i32, i32) {
    %c0_i32 = arith.constant 0 : i32
    %c0_i32_0 = arith.constant 0 : i32
    %c0_i32_1 = arith.constant 0 : i32
    return %c0_i32, %c0_i32_0 : i32, i32
  }
  func.func @transform_9(%arg0: i32, %arg1: i32) -> (i32, i32, i32) {
    %c0_i32 = arith.constant 0 : i32
    %c0_i32_0 = arith.constant 0 : i32
    return %arg0, %arg1, %c0_i32 : i32, i32, i32
  }
}

</mosaic_0001>

<llo_original>
// kernel: condition_modulation_block.4
$region0: #{condition_modulation_block.4}
  #allocation0 [shape = 'u32[]', space=smem, size = 0x4, offset = 0x4, fixed_abs, tag = 'smem constant byte address 0x4 - core index']
  #allocation1 [shape = 'u32[72,128]{1,0:T(1,128)}', space=vmem, size = 0x9000, scoped, tag = 'internal scratch']
  %s0 = inlined_call_operand.vmem [shape: bf16[8,16], index: 0, kind: input, shape index: {}]
  %s1 = inlined_call_operand.vmem [shape: bf16[16,32], index: 1, kind: input, shape index: {}]
  %s2 = inlined_call_operand.vmem [shape: f32[1,32], index: 2, kind: input, shape index: {}]
  %s3 = inlined_call_operand.vmem [shape: f32[8,32], index: 3, kind: output, shape index: {}]
  %s4 = sld [smem:[#allocation0]]
  $region22: #{condition_modulation_block.4} parent=0
    _
  %s6 = ssub.s32 1, %s4
  %s7 = scalar_select 0, %s6, %s4
  // Predicated region
  $region2: #{condition_modulation_block.4} parent=0 // pred_check
    _
  $region3: #{condition_modulation_block.4} parent=0 // pred_check_branch
    %9 = sbr.rel (0) target = $region5
  $region4: #{condition_modulation_block.4} parent=0 // pred_region
    _
  $region5: #{condition_modulation_block.4} parent=0 // pred_fallthru
    _
  // Predicated region
  $region6: #{condition_modulation_block.4} parent=0 // pred_check
    _
  $region7: #{condition_modulation_block.4} parent=0 // pred_check_branch
    %11 = sbr.rel (0) target = $region9
  $region8: #{condition_modulation_block.4} parent=0 // pred_region
    _
  $region9: #{condition_modulation_block.4} parent=0 // pred_fallthru
    _
  // Predicated region
  $region10: #{condition_modulation_block.4} parent=0 // pred_check
    _
  $region11: #{condition_modulation_block.4} parent=0 // pred_check_branch
    %13 = sbr.rel (0) target = $region13
  $region12: #{condition_modulation_block.4} parent=0 // pred_region
    _
  $region13: #{condition_modulation_block.4} parent=0 // pred_fallthru
    _
  %v15 = vld [vmem:[%s0] sm:$0xf]
  %v16 = vld [vmem:[%s1] sm:$0xf]
  %v17 = vld [vmem:[%s1 + $0x4] sm:$0xf]
  %v18 = vld [vmem:[%s2] sm:$0x1]
  %v20 = vperm.slane %v18, 0
  %v24 = vunpack.c.l.b16 %v16
  %v25 = vunpack.c.l.b16 %v17
  %v26 = vpack.c.b16 %v25, %v24
  %vm28 = vcmask 130048
  %v30 = vsel %vm28, %v15, 0
  %32 = vmatpush.bf16.msra.mxu0 0
  %33 = vmatpush.bf16.msra.mxu0 0
  %34 = vmatpush.bf16.msra.mxu0 0
  %35 = vmatpush.bf16.msra.mxu0 0
  %36 = vmatpush.bf16.msra.mxu0 0
  %37 = vmatpush.bf16.msra.mxu0 0
  %38 = vmatpush.bf16.msra.mxu0 0
  %39 = vmatpush.bf16.msra.mxu0 %v26
  %40 = vmatmul.bf16.gmra.mxu0 %v30
  %v41 = vpop.f32.mrf.mxu0
  %v42 = vadd.f32 %v20, %v41
  %v43 = vpop.f32.mrf.mxu0
  %44 = vdwg.mxu0
  %vm45 = vcmask 261120
  %46 = vst.msk [vmem:[%s3] sm:$0xff] %vm45, %v42
  // Predicated region
  $region14: #{condition_modulation_block.4} parent=0 // pred_check
    _
  $region15: #{condition_modulation_block.4} parent=0 // pred_check_branch
    %48 = sbr.rel (0) target = $region17
  $region16: #{condition_modulation_block.4} parent=0 // pred_region
    _
  $region17: #{condition_modulation_block.4} parent=0 // pred_fallthru
    _
  // Predicated region
  $region18: #{condition_modulation_block.4} parent=0 // pred_check
    _
  $region19: #{condition_modulation_block.4} parent=0 // pred_check_branch
    %50 = sbr.rel (0) target = $region21
  $region20: #{condition_modulation_block.4} parent=0 // pred_region
    _
  $region21: #{condition_modulation_block.4} parent=0 // pred_fallthru
    _

// kernel: condition_modulation_block.6
$region0: #{condition_modulation_block.6}
  #allocation0 [shape = 'u32[]', space=smem, size = 0x4, offset = 0x4, fixed_abs, tag = 'smem constant byte address 0x4 - core index']
  #allocation1 [shape = 'u32[72,128]{1,0:T(1,128)}', space=vmem, size = 0x9000, scoped, tag = 'internal scratch']
  #allocation2 [shape = 'f32[8,64]{1,0:T(8,128)}', space=vmem, size = 0x1000, scoped, tag = 'scratch operand']
  %s0 = inlined_call_operand.vmem [shape: f32[2,16,64], index: 0, kind: input, shape index: {}]
  %s1 = inlined_call_operand.vmem [shape: f32[4,64], index: 1, kind: input, shape index: {}]
  %s2 = inlined_call_operand.vmem [shape: f32[1,64], index: 2, kind: input, shape index: {}]
  %s3 = inlined_call_operand.vmem [shape: bf16[64,32], index: 3, kind: input, shape index: {}]
  %s4 = inlined_call_operand.vmem [shape: f32[2,16,64], index: 4, kind: output, shape index: {0}]
  %s5 = inlined_call_operand.vmem [shape: f32[2,16,32], index: 5, kind: output, shape index: {1}]
  %6 = xla_tuple %s4, %s5
  %s7 = sld [smem:[#allocation0]]
  $region61: #{condition_modulation_block.6} parent=0
    _
  %s9 = ssub.s32 1, %s7
  %s10 = scalar_select 0, %s9, %s7
  loop: start=0, step=1, limit=6
  $region2: #{condition_modulation_block.6} parent=0 // loop_pre_header
    _
  $region3: #{condition_modulation_block.6} parent=0 // loop_header
    %s12 = sphi 0, %s16
    %p13 = scmp.ge.s32.totalorder %s12, 6
    %s19 = sphi 0, %s31
    %s20 = sphi 0, %s27
    %s21 = sphi 0, %s19
    %s22 = sphi 0, %s20
    %s23 = sphi 0, %s21
    %s24 = sphi 0, %s22
    %s36 = sphi 0, %s38
    %s39 = sphi 0, %s36
    %s40 = sphi 0, %s39
    %s56 = sphi 0, %s40
    %s60 = sphi 0, %s60
    %s62 = sphi 0, %s60
    %s63 = sphi 0, %s62
    %s77 = sphi 0, %s63
    %s81 = sphi 0, %s81
    %s83 = sphi 0, %s81
    %s84 = sphi 0, %s83
    %s98 = sphi 0, %s84
    %s102 = sphi 0, %s102
    %s104 = sphi 0, %s102
    %s105 = sphi 0, %s104
    %s119 = sphi 0, %s105
    %s127 = sphi 0, %s129
    %s130 = sphi 0, %s127
    %s131 = sphi 0, %s130
    %s147 = sphi 0, %s131
    %s155 = sphi 0, %s157
    %s158 = sphi 0, %s155
    %s159 = sphi 0, %s158
    %s175 = sphi 0, %s159
  $region4: #{condition_modulation_block.6} parent=0 // loop_header_branch
    %15 = sbr.rel (%p13) target = $region8
  $region5: #{condition_modulation_block.6} parent=0 // loop_body
    %s17 = ssub.s32 %s12, 1
    %s18 = ssub.s32 %s12, 2
    %s25 = sadd.s32 1, %s20
    %p26 = scmp.ge.s32.totalorder %s25, 2
    %s27 = scalar_select %p26, 0, %s25
    %s28 = sadd.s32 1, %s19
    %s29 = scalar_select %p26, %s28, %s19
    %p30 = scmp.ge.s32.totalorder %s29, 2
    %s31 = scalar_select %p30, 0, %s29
    %s32 = ssub.s32 %s19, %s31
    %s33 = ssub.s32 %s20, %s27
    %s34 = sor.u32 %s32, %s33
    %p35 = scmp.eq.s32.totalorder %s34, 0
    %s37 = sadd.s32 %s36, 1
    %s38 = scalar_select %p35, %s36, %s37
    %p41 = pneg %p35
    %p42 = scmp.eq.s32.totalorder %s12, 3
    %p43 = por %p41, %p42
    %p44 = scmp.ne.s32.totalorder %s36, %s39
    %p45 = scmp.eq.s32.totalorder %s12, 0
    %p46 = por %p44, %p45
    %p47 = scmp.ne.s32.totalorder %s36, %s39
    %p48 = scmp.eq.s32.totalorder %s17, 3
    %p49 = por %p47, %p48
    %p50 = scmp.ne.s32.totalorder %s39, %s40
    %p51 = scmp.eq.s32.totalorder %s17, 0
    %p52 = por %p50, %p51
    %p53 = scmp.ne.s32.totalorder %s39, %s40
    %p54 = scmp.eq.s32.totalorder %s18, 3
    %p55 = por %p53, %p54
    %p57 = scmp.ne.s32.totalorder %s40, %s56
    %p58 = scmp.eq.s32.totalorder %s18, 0
    %p59 = por %p57, %p58
    %s61 = sadd.s32 %s60, 1
    %p64 = scmp.eq.s32.totalorder %s12, 3
    %p65 = scmp.ne.s32.totalorder %s60, %s62
    %p66 = scmp.eq.s32.totalorder %s12, 0
    %p67 = por %p65, %p66
    %p68 = scmp.ne.s32.totalorder %s60, %s62
    %p69 = scmp.eq.s32.totalorder %s17, 3
    %p70 = por %p68, %p69
    %p71 = scmp.ne.s32.totalorder %s62, %s63
    %p72 = scmp.eq.s32.totalorder %s17, 0
    %p73 = por %p71, %p72
    %p74 = scmp.ne.s32.totalorder %s62, %s63
    %p75 = scmp.eq.s32.totalorder %s18, 3
    %p76 = por %p74, %p75
    %p78 = scmp.ne.s32.totalorder %s63, %s77
    %p79 = scmp.eq.s32.totalorder %s18, 0
    %p80 = por %p78, %p79
    %s82 = sadd.s32 %s81, 1
    %p85 = scmp.eq.s32.totalorder %s12, 3
    %p86 = scmp.ne.s32.totalorder %s81, %s83
    %p87 = scmp.eq.s32.totalorder %s12, 0
    %p88 = por %p86, %p87
    %p89 = scmp.ne.s32.totalorder %s81, %s83
    %p90 = scmp.eq.s32.totalorder %s17, 3
    %p91 = por %p89, %p90
    %p92 = scmp.ne.s32.totalorder %s83, %s84
    %p93 = scmp.eq.s32.totalorder %s17, 0
    %p94 = por %p92, %p93
    %p95 = scmp.ne.s32.totalorder %s83, %s84
    %p96 = scmp.eq.s32.totalorder %s18, 3
    %p97 = por %p95, %p96
    %p99 = scmp.ne.s32.totalorder %s84, %s98
    %p100 = scmp.eq.s32.totalorder %s18, 0
    %p101 = por %p99, %p100
    %s103 = sadd.s32 %s102, 1
    %p106 = scmp.eq.s32.totalorder %s12, 3
    %p107 = scmp.ne.s32.totalorder %s102, %s104
    %p108 = scmp.eq.s32.totalorder %s12, 0
    %p109 = por %p107, %p108
    %p110 = scmp.ne.s32.totalorder %s102, %s104
    %p111 = scmp.eq.s32.totalorder %s17, 3
    %p112 = por %p110, %p111
    %p113 = scmp.ne.s32.totalorder %s104, %s105
    %p114 = scmp.eq.s32.totalorder %s17, 0
    %p115 = por %p113, %p114
    %p116 = scmp.ne.s32.totalorder %s104, %s105
    %p117 = scmp.eq.s32.totalorder %s18, 3
    %p118 = por %p116, %p117
    %p120 = scmp.ne.s32.totalorder %s105, %s119
    %p121 = scmp.eq.s32.totalorder %s18, 0
    %p122 = por %p120, %p121
    %s123 = ssub.s32 %s19, %s31
    %s124 = ssub.s32 %s20, %s27
    %s125 = sor.u32 %s123, %s124
    %p126 = scmp.eq.s32.totalorder %s125, 0
    %s128 = sadd.s32 %s127, 1
    %s129 = scalar_select %p126, %s127, %s128
    %p132 = pneg %p126
    %p133 = scmp.eq.s32.totalorder %s12, 3
    %p134 = por %p132, %p133
    %p135 = scmp.ne.s32.totalorder %s127, %s130
    %p136 = scmp.eq.s32.totalorder %s12, 0
    %p137 = por %p135, %p136
    %p138 = scmp.ne.s32.totalorder %s127, %s130
    %p139 = scmp.eq.s32.totalorder %s17, 3
    %p140 = por %p138, %p139
    %p141 = scmp.ne.s32.totalorder %s130, %s131
    %p142 = scmp.eq.s32.totalorder %s17, 0
    %p143 = por %p141, %p142
    %p144 = scmp.ne.s32.totalorder %s130, %s131
    %p145 = scmp.eq.s32.totalorder %s18, 3
    %p146 = por %p144, %p145
    %p148 = scmp.ne.s32.totalorder %s131, %s147
    %p149 = scmp.eq.s32.totalorder %s18, 0
    %p150 = por %p148, %p149
    %s151 = ssub.s32 %s19, %s31
    %s152 = ssub.s32 %s20, %s27
    %s153 = sor.u32 %s151, %s152
    %p154 = scmp.eq.s32.totalorder %s153, 0
    %s156 = sadd.s32 %s155, 1
    %s157 = scalar_select %p154, %s155, %s156
    %p160 = pneg %p154
    %p161 = scmp.eq.s32.totalorder %s12, 3
    %p162 = por %p160, %p161
    %p163 = scmp.ne.s32.totalorder %s155, %s158
    %p164 = scmp.eq.s32.totalorder %s12, 0
    %p165 = por %p163, %p164
    %p166 = scmp.ne.s32.totalorder %s155, %s158
    %p167 = scmp.eq.s32.totalorder %s17, 3
    %p168 = por %p166, %p167
    %p169 = scmp.ne.s32.totalorder %s158, %s159
    %p170 = scmp.eq.s32.totalorder %s17, 0
    %p171 = por %p169, %p170
    %p172 = scmp.ne.s32.totalorder %s158, %s159
    %p173 = scmp.eq.s32.totalorder %s18, 3
    %p174 = por %p172, %p173
    %p176 = scmp.ne.s32.totalorder %s159, %s175
    %p177 = scmp.eq.s32.totalorder %s18, 0
    %p178 = por %p176, %p177
    %p179 = scmp.le.s32.totalorder 1, %s12
    %p180 = scmp.lt.s32.totalorder %s12, 5
    %p181 = pnand %p179, %p180
    %p182 = pneg %p181
    // Predicated region
    $region9: #{condition_modulation_block.6} parent=5 // pred_check
      _
    $region10: #{condition_modulation_block.6} parent=5 // pred_check_branch
      %184 = sbr.rel (%p181) target = $region12
    $region11: #{condition_modulation_block.6} parent=5 // pred_region
      %s185 = ssub.s32 %s12, 1
      // Predicated region
      $region13: #{condition_modulation_block.6} parent=11 // pred_check
        %p186 = pneg %p73
      $region14: #{condition_modulation_block.6} parent=11 // pred_check_branch
        %188 = sbr.rel (%p186) target = $region16
      $region15: #{condition_modulation_block.6} parent=11 // pred_region
        _
      $region16: #{condition_modulation_block.6} parent=11 // pred_fallthru
        _
      // Predicated region
      $region17: #{condition_modulation_block.6} parent=11 // pred_check
        %p189 = pneg %p94
      $region18: #{condition_modulation_block.6} parent=11 // pred_check_branch
        %191 = sbr.rel (%p189) target = $region20
      $region19: #{condition_modulation_block.6} parent=11 // pred_region
        _
      $region20: #{condition_modulation_block.6} parent=11 // pred_fallthru
        _
      // Predicated region
      $region21: #{condition_modulation_block.6} parent=11 // pred_check
        %p192 = pneg %p115
      $region22: #{condition_modulation_block.6} parent=11 // pred_check_branch
        %194 = sbr.rel (%p192) target = $region24
      $region23: #{condition_modulation_block.6} parent=11 // pred_region
        _
      $region24: #{condition_modulation_block.6} parent=11 // pred_fallthru
        _
    $region12: #{condition_modulation_block.6} parent=5 // pred_fallthru
      _
    %p195 = scmp.lt.s32.totalorder %s12, 4
    // Predicated region
    $region25: #{condition_modulation_block.6} parent=5 // pred_check
      %p196 = pneg %p195
    $region26: #{condition_modulation_block.6} parent=5 // pred_check_branch
      %198 = sbr.rel (%p196) target = $region28
    $region27: #{condition_modulation_block.6} parent=5 // pred_region
      // Predicated region
      $region29: #{condition_modulation_block.6} parent=27 // pred_check
        %p199 = pneg %p46
      $region30: #{condition_modulation_block.6} parent=27 // pred_check_branch
        %201 = sbr.rel (%p199) target = $region32
      $region31: #{condition_modulation_block.6} parent=27 // pred_region
        %p202 = scmp.lt.s32.totalorder %s19, 1
        %s203 = scalar_select %p202, %s19, 1
        %p204 = scmp.lt.s32.totalorder %s20, 1
        %s205 = scalar_select %p204, %s20, 1
        %s206 = smul.addr %s203, 2
        %s207 = sadd.s32 %s205, %s206
        %s208 = smul.addr %s207, 8
        %s209 = scalar_lea.vmem %s0, %s208
      $region32: #{condition_modulation_block.6} parent=27 // pred_fallthru
        _
    $region28: #{condition_modulation_block.6} parent=5 // pred_fallthru
      _
    %p210 = scmp.le.s32.totalorder 1, %s12
    %p211 = scmp.lt.s32.totalorder %s12, 5
    %p212 = pnand %p210, %p211
    %p213 = pneg %p212
    // Predicated region
    $region33: #{condition_modulation_block.6} parent=5 // pred_check
      _
    $region34: #{condition_modulation_block.6} parent=5 // pred_check_branch
      %215 = sbr.rel (%p212) target = $region36
    $region35: #{condition_modulation_block.6} parent=5 // pred_region
      %s216 = ssub.s32 %s12, 1
      %p217 = scmp.lt.s32.totalorder %s21, 1
      %s218 = scalar_select %p217, %s21, 1
      %p219 = scmp.lt.s32.totalorder %s22, 1
      %s220 = scalar_select %p219, %s22, 1
      %s221 = smul.addr %s218, 2
      %s222 = sadd.s32 %s220, %s221
      %s223 = smul.addr %s222, 8
      %s224 = scalar_lea.vmem %s0, %s223
      %p225 = pneg %p52
      %p226 = pneg %p49
      %p227 = pneg %p73
      %p228 = pneg %p70
      %p229 = pneg %p94
      %p230 = pneg %p91
      %p231 = pneg %p115
      %p232 = pneg %p112
      %p233 = pneg %p143
      %p234 = pneg %p140
      %p235 = scmp.lt.s32.totalorder %s21, 1
      %s236 = scalar_select %p235, %s21, 1
      %p237 = scmp.lt.s32.totalorder %s22, 1
      %s238 = scalar_select %p237, %s22, 1
      %s239 = smul.addr %s236, 2
      %s240 = sadd.s32 %s238, %s239
      %s241 = smul.addr %s240, 8
      %s242 = scalar_lea.vmem %s4, %s241
      %p243 = pneg %p171
      %p244 = pneg %p168
      %p245 = scmp.lt.s32.totalorder %s21, 1
      %s246 = scalar_select %p245, %s21, 1
      %p247 = scmp.lt.s32.totalorder %s22, 1
      %s248 = scalar_select %p247, %s22, 1
      %s249 = smul.addr %s246, 2
      %s250 = sadd.s32 %s248, %s249
      %s251 = smul.addr %s250, 8
      %s252 = scalar_lea.vmem %s5, %s251
      %p253 = scmp.lt.s32.totalorder %s21, 1
      %s254 = scalar_select %p253, %s21, 1
      %p255 = scmp.lt.s32.totalorder %s22, 1
      %s256 = scalar_select %p255, %s22, 1
      %s257 = smul.addr %s254, 2
      %s258 = sadd.s32 %s256, %s257
      %s259 = smul.addr %s258, 8
      %s260 = scalar_lea.vmem %s0, %s259
      %p261 = scmp.lt.s32.totalorder %s21, 1
      %s262 = scalar_select %p261, %s21, 1
      %p263 = scmp.lt.s32.totalorder %s22, 1
      %s264 = scalar_select %p263, %s22, 1
      %s265 = smul.addr %s262, 2
      %s266 = sadd.s32 %s264, %s265
      %s267 = smul.addr %s266, 8
      %s268 = scalar_lea.vmem %s4, %s267
      %p269 = scmp.lt.s32.totalorder %s21, 1
      %s270 = scalar_select %p269, %s21, 1
      %p271 = scmp.lt.s32.totalorder %s22, 1
      %s272 = scalar_select %p271, %s22, 1
      %s273 = smul.addr %s270, 2
      %s274 = sadd.s32 %s272, %s273
      %s275 = smul.addr %s274, 8
      %s276 = scalar_lea.vmem %s5, %s275
      %p278 = scmp.eq.s32.totalorder %s22, 0
      // Predicated region
      $region37: #{condition_modulation_block.6} parent=35 // pred_check
        %p279 = pneg %p278
      $region38: #{condition_modulation_block.6} parent=35 // pred_check_branch
        %281 = sbr.rel (%p279) target = $region40
      $region39: #{condition_modulation_block.6} parent=35 // pred_region
        %vm282 = vcmask 523264
        %283 = vst.msk [vmem:[#allocation2] sm:$0xff] %vm282, 0.0
      $region40: #{condition_modulation_block.6} parent=35 // pred_fallthru
        _
      %v284 = vld [vmem:[%s260] sm:$0xff]
      %v285 = vld [vmem:[#allocation2] sm:$0xff]
      %v286 = vld [vmem:[%s1] sm:$0x1]
      %v287 = vperm.slane %v286, 0
      %v288 = vmul.f32 %v285, %v287
      %v289 = vmul.f32 %v284, %v287
      %v290 = vld [vmem:[%s1 + $0x1] sm:$0x1]
      %v291 = vperm.slane %v290, 0
      %v292 = vmul.f32 %v285, %v291
      %v293 = vmul.f32 %v284, %v291
      %vm296 = vcmask 1046528
      %v297 = vrot.slane %v292, 1
      %v298 = vrot.slane %v293, 1
      %v299 = vsel %vm296, %v297, %v298
      %v302 = vadd.f32 %v288, %v299
      %v303 = vadd.f32 %v289, %v298
      %v304 = vld [vmem:[%s1 + $0x2] sm:$0x1]
      %v305 = vperm.slane %v304, 0
      %v306 = vmul.f32 %v285, %v305
      %v307 = vmul.f32 %v284, %v305
      %vm310 = vcmask 1045504
      %v311 = vrot.slane %v306, 2
      %v312 = vrot.slane %v307, 2
      %v313 = vsel %vm310, %v311, %v312
      %v316 = vadd.f32 %v302, %v313
      %v317 = vadd.f32 %v303, %v312
      %v318 = vld [vmem:[%s1 + $0x3] sm:$0x1]
      %v319 = vperm.slane %v318, 0
      %v320 = vmul.f32 %v284, %v319
      %v322 = vrot.slane %v320, 3
      %v324 = vadd.f32 %v316, %v322
      %v325 = vadd.f32 %v317, %v322
      %v326 = vld [vmem:[%s2] sm:$0x1]
      %v328 = vperm.slane %v326, 0
      %v330 = vadd.f32 %v324, %v328
      %v331 = vadd.f32 %v325, %v328
      %vm332 = vcmask 523264
      %333 = vst.msk [vmem:[#allocation2] sm:$0xff] %vm332, %v284
      %v334 = vxor.u32 %v330, 2147483648
      %v335 = vxor.u32 %v331, 2147483648
      %v336 = vmul.f32 %v334, 1.442695
      %v337 = vpow.pop %v336
      %v338 = vmul.f32 %v335, 1.442695
      %v339 = vpow.pop %v338
      %v340 = vadd.f32 %v337, 1.0
      %v341 = vadd.f32 %v339, 1.0
      %v342 = vrcp.pop %v340
      %v343 = vmul.f32 %v340, %v342
      %v344 = vsub.f32 1.0, %v343
      %v345 = vmul.f32 %v342, %v344
      %v346 = vadd.f32 %v342, %v345
      %vm347 = vweird.f32 %v340
      %vm348 = vweird.f32 %v342
      %vm349 = vmor %vm347, %vm348
      %v350 = vsel %vm349, %v342, %v346
      %v351 = vand.u32 2147483647, %v340
      %vm352 = vcmp.eq.f32.partialorder %v351, 8.507059e+37
      %v353 = vand.u32 %v340, 2147483648
      %v354 = vor.u32 1.1754944e-38, %v353
      %v355 = vsel %vm352, %v354, %v350
      %v356 = vmul.f32 1.0, %v355
      %v357 = vrcp.pop %v341
      %v358 = vmul.f32 %v341, %v357
      %v359 = vsub.f32 1.0, %v358
      %v360 = vmul.f32 %v357, %v359
      %v361 = vadd.f32 %v357, %v360
      %vm362 = vweird.f32 %v341
      %vm363 = vweird.f32 %v357
      %vm364 = vmor %vm362, %vm363
      %v365 = vsel %vm364, %v357, %v361
      %v366 = vand.u32 2147483647, %v341
      %vm367 = vcmp.eq.f32.partialorder %v366, 8.507059e+37
      %v368 = vand.u32 %v341, 2147483648
      %v369 = vor.u32 1.1754944e-38, %v368
      %v370 = vsel %vm367, %v369, %v365
      %v371 = vmul.f32 1.0, %v370
      %v372 = vmul.f32 %v330, %v356
      %v373 = vmul.f32 %v331, %v371
      %vm374 = vcmask 523269
      %375 = vst.msk [vmem:[%s268 - $0x5] sm:$0xe0] %vm374, %v372
      %vm376 = vcmask 520192
      %377 = vst.msk [vmem:[%s268 + $0x3] sm:$0x1f] %vm376, %v373
      %v378 = vpack.c.bf16 %v373, %v372
      %v379 = vld [vmem:[%s3] sm:$0xf]
      %v380 = vld [vmem:[%s3 + $0x4] sm:$0xf]
      %v381 = vld [vmem:[%s3 + $0x8] sm:$0xf]
      %v382 = vld [vmem:[%s3 + $0xc] sm:$0xf]
      %v383 = vld [vmem:[%s3 + $0x10] sm:$0xf]
      %v384 = vld [vmem:[%s3 + $0x14] sm:$0xf]
      %v385 = vld [vmem:[%s3 + $0x18] sm:$0xf]
      %v386 = vld [vmem:[%s3 + $0x1c] sm:$0xf]
      %v388 = vshrl.u32 %v378, 16
      %v390 = vrot.slane %v388, 2
      %v391 = vshll.u32 %v378, 16
      %v393 = vrot.slane %v391, 3
      %v394 = vor.u32 %v390, %v393
      %v403 = vunpack.c.l.b16 %v379
      %v404 = vunpack.c.l.b16 %v380
      %v405 = vunpack.c.l.b16 %v381
      %v406 = vunpack.c.l.b16 %v382
      %v407 = vunpack.c.l.b16 %v383
      %v408 = vunpack.c.l.b16 %v384
      %v409 = vunpack.c.l.b16 %v385
      %v410 = vunpack.c.l.b16 %v386
      %v411 = vpack.c.b16 %v404, %v403
      %v412 = vpack.c.b16 %v406, %v405
      %v413 = vpack.c.b16 %v408, %v407
      %v414 = vpack.c.b16 %v410, %v409
      %v420 = vsel %vm332, %v394, 0
      %422 = vmatpush.bf16.msra.mxu0 0
      %423 = vmatpush.bf16.msra.mxu0 0
      %424 = vmatpush.bf16.msra.mxu0 0
      %425 = vmatpush.bf16.msra.mxu0 0
      %426 = vmatpush.bf16.msra.mxu0 %v414
      %427 = vmatpush.bf16.msra.mxu0 %v413
      %428 = vmatpush.bf16.msra.mxu0 %v412
      %429 = vmatpush.bf16.msra.mxu0 %v411
      %430 = vmatmul.bf16.gmra.mxu0 %v420
      %v431 = vpop.f32.mrf.mxu0
      %v432 = vadd.f32 0.0, %v431
      %v433 = vpop.f32.mrf.mxu0
      %434 = vdwg.mxu0
      %vm435 = vcmask 261120
      %436 = vst.msk [vmem:[%s276] sm:$0xff] %vm435, %v432
      %p437 = scmp.lt.s32.totalorder %s21, 1
      %s438 = scalar_select %p437, %s21, 1
      %p439 = scmp.lt.s32.totalorder %s22, 1
      %s440 = scalar_select %p439, %s22, 1
      %s441 = smul.addr %s438, 2
      %s442 = sadd.s32 %s440, %s441
      %s443 = smul.addr %s442, 8
      %s444 = scalar_lea.vmem %s4, %s443
      %p445 = scmp.lt.s32.totalorder %s21, 1
      %s446 = scalar_select %p445, %s21, 1
      %p447 = scmp.lt.s32.totalorder %s22, 1
      %s448 = scalar_select %p447, %s22, 1
      %s449 = smul.addr %s446, 2
      %s450 = sadd.s32 %s448, %s449
      %s451 = smul.addr %s450, 8
      %s452 = scalar_lea.vmem %s5, %s451
      // Predicated region
      $region41: #{condition_modulation_block.6} parent=35 // pred_check
        %p453 = pneg %p140
      $region42: #{condition_modulation_block.6} parent=35 // pred_check_branch
        %455 = sbr.rel (%p453) target = $region44
      $region43: #{condition_modulation_block.6} parent=35 // pred_region
        _
      $region44: #{condition_modulation_block.6} parent=35 // pred_fallthru
        _
      // Predicated region
      $region45: #{condition_modulation_block.6} parent=35 // pred_check
        %p456 = pneg %p168
      $region46: #{condition_modulation_block.6} parent=35 // pred_check_branch
        %458 = sbr.rel (%p456) target = $region48
      $region47: #{condition_modulation_block.6} parent=35 // pred_region
        _
      $region48: #{condition_modulation_block.6} parent=35 // pred_fallthru
        _
    $region36: #{condition_modulation_block.6} parent=5 // pred_fallthru
      _
    %p459 = scmp.le.s32.totalorder 2, %s12
    // Predicated region
    $region49: #{condition_modulation_block.6} parent=5 // pred_check
      %p460 = pneg %p459
    $region50: #{condition_modulation_block.6} parent=5 // pred_check_branch
      %462 = sbr.rel (%p460) target = $region52
    $region51: #{condition_modulation_block.6} parent=5 // pred_region
      %s463 = ssub.s32 %s12, 2
      // Predicated region
      $region53: #{condition_modulation_block.6} parent=51 // pred_check
        %p464 = pneg %p146
      $region54: #{condition_modulation_block.6} parent=51 // pred_check_branch
        %466 = sbr.rel (%p464) target = $region56
      $region55: #{condition_modulation_block.6} parent=51 // pred_region
        %p467 = scmp.lt.s32.totalorder %s23, 1
        %s468 = scalar_select %p467, %s23, 1
        %p469 = scmp.lt.s32.totalorder %s24, 1
        %s470 = scalar_select %p469, %s24, 1
        %s471 = smul.addr %s468, 2
        %s472 = sadd.s32 %s470, %s471
        %s473 = smul.addr %s472, 8
        %s474 = scalar_lea.vmem %s4, %s473
      $region56: #{condition_modulation_block.6} parent=51 // pred_fallthru
        _
      // Predicated region
      $region57: #{condition_modulation_block.6} parent=51 // pred_check
        %p475 = pneg %p174
      $region58: #{condition_modulation_block.6} parent=51 // pred_check_branch
        %477 = sbr.rel (%p475) target = $region60
      $region59: #{condition_modulation_block.6} parent=51 // pred_region
        %p478 = scmp.lt.s32.totalorder %s23, 1
        %s479 = scalar_select %p478, %s23, 1
        %p480 = scmp.lt.s32.totalorder %s24, 1
        %s481 = scalar_select %p480, %s24, 1
        %s482 = smul.addr %s479, 2
        %s483 = sadd.s32 %s481, %s482
        %s484 = smul.addr %s483, 8
        %s485 = scalar_lea.vmem %s5, %s484
      $region60: #{condition_modulation_block.6} parent=51 // pred_fallthru
        _
    $region52: #{condition_modulation_block.6} parent=5 // pred_fallthru
      _
  $region6: #{condition_modulation_block.6} parent=0 // loop_footer
    %s16 = sadd.s32 1, %s12
  $region7: #{condition_modulation_block.6} parent=0 // loop_footer_branch
    %11 = sbr.rel target = $region3
  $region8: #{condition_modulation_block.6} parent=0 // loop_exit
    _

// kernel: condition_modulation_block.5
$region0: #{condition_modulation_block.5}
  #allocation0 [shape = 'u32[]', space=smem, size = 0x4, offset = 0x4, fixed_abs, tag = 'smem constant byte address 0x4 - core index']
  #allocation1 [shape = 'u32[72,128]{1,0:T(1,128)}', space=vmem, size = 0x9000, scoped, tag = 'internal scratch']
  %s0 = inlined_call_operand.vmem [shape: f32[32,32], index: 0, kind: input, shape index: {}]
  %s1 = inlined_call_operand.vmem [shape: f32[1,32], index: 1, kind: input, shape index: {}]
  %s2 = inlined_call_operand.vmem [shape: f32[1,32], index: 2, kind: input, shape index: {}]
  %s3 = inlined_call_operand.vmem [shape: bf16[32,64], index: 3, kind: input, shape index: {}]
  %s4 = inlined_call_operand.vmem [shape: bf16[32,64], index: 4, kind: input, shape index: {}]
  %s5 = inlined_call_operand.vmem [shape: f32[32,64], index: 5, kind: output, shape index: {0}]
  %s6 = inlined_call_operand.vmem [shape: f32[32,64], index: 6, kind: output, shape index: {1}]
  %7 = xla_tuple %s5, %s6
  %s8 = sld [smem:[#allocation0]]
  $region38: #{condition_modulation_block.5} parent=0
    _
  %s10 = ssub.s32 1, %s8
  %s11 = scalar_select 0, %s10, %s8
  // Predicated region
  $region2: #{condition_modulation_block.5} parent=0 // pred_check
    _
  $region3: #{condition_modulation_block.5} parent=0 // pred_check_branch
    %13 = sbr.rel (0) target = $region5
  $region4: #{condition_modulation_block.5} parent=0 // pred_region
    _
  $region5: #{condition_modulation_block.5} parent=0 // pred_fallthru
    _
  // Predicated region
  $region6: #{condition_modulation_block.5} parent=0 // pred_check
    _
  $region7: #{condition_modulation_block.5} parent=0 // pred_check_branch
    %15 = sbr.rel (0) target = $region9
  $region8: #{condition_modulation_block.5} parent=0 // pred_region
    _
  $region9: #{condition_modulation_block.5} parent=0 // pred_fallthru
    _
  // Predicated region
  $region10: #{condition_modulation_block.5} parent=0 // pred_check
    _
  $region11: #{condition_modulation_block.5} parent=0 // pred_check_branch
    %17 = sbr.rel (0) target = $region13
  $region12: #{condition_modulation_block.5} parent=0 // pred_region
    _
  $region13: #{condition_modulation_block.5} parent=0 // pred_fallthru
    _
  // Predicated region
  $region14: #{condition_modulation_block.5} parent=0 // pred_check
    _
  $region15: #{condition_modulation_block.5} parent=0 // pred_check_branch
    %19 = sbr.rel (0) target = $region17
  $region16: #{condition_modulation_block.5} parent=0 // pred_region
    _
  $region17: #{condition_modulation_block.5} parent=0 // pred_fallthru
    _
  // Predicated region
  $region18: #{condition_modulation_block.5} parent=0 // pred_check
    _
  $region19: #{condition_modulation_block.5} parent=0 // pred_check_branch
    %21 = sbr.rel (0) target = $region21
  $region20: #{condition_modulation_block.5} parent=0 // pred_region
    _
  $region21: #{condition_modulation_block.5} parent=0 // pred_fallthru
    _
  %v23 = vld [vmem:[%s0] sm:$0xff]
  %v24 = vld [vmem:[%s0 + $0x8] sm:$0xff]
  %v25 = vld [vmem:[%s0 + $0x10] sm:$0xff]
  %v26 = vld [vmem:[%s0 + $0x18] sm:$0xff]
  %vm27 = vcmask 261120
  %v28 = vsel %vm27, %v23, 0.0
  %29 = vadd.xlane.f32.xlu0 %v28
  %v30 = vpop.xlane.xlu0 %29
  %v31 = vsel %vm27, %v24, 0.0
  %32 = vadd.xlane.f32.xlu0 %v31
  %v33 = vpop.xlane.xlu0 %32
  %v34 = vsel %vm27, %v25, 0.0
  %35 = vadd.xlane.f32.xlu0 %v34
  %v36 = vpop.xlane.xlu0 %35
  %v37 = vsel %vm27, %v26, 0.0
  %38 = vadd.xlane.f32.xlu0 %v37
  %v39 = vpop.xlane.xlu0 %38
  %v40 = vrcp.pop 32.0
  %v41 = vmul.f32 32.0, %v40
  %v42 = vsub.f32 1.0, %v41
  %v43 = vmul.f32 %v40, %v42
  %v44 = vadd.f32 %v40, %v43
  %vm45 = vweird.f32 %v40
  %v46 = vsel %vm45, %v40, %v44
  %v47 = vmul.f32 %v30, %v46
  %v48 = vmul.f32 %v33, %v46
  %v49 = vmul.f32 %v36, %v46
  %v50 = vmul.f32 %v39, %v46
  %v51 = vsub.f32 %v23, %v47
  %v52 = vsub.f32 %v24, %v48
  %v53 = vsub.f32 %v25, %v49
  %v54 = vsub.f32 %v26, %v50
  %v55 = vmul.f32 %v51, %v51
  %v56 = vmul.f32 %v52, %v52
  %v57 = vmul.f32 %v53, %v53
  %v58 = vmul.f32 %v54, %v54
  %v59 = vsel %vm27, %v55, 0.0
  %60 = vadd.xlane.f32.xlu0 %v59
  %v61 = vpop.xlane.xlu0 %60
  %v62 = vsel %vm27, %v56, 0.0
  %63 = vadd.xlane.f32.xlu0 %v62
  %v64 = vpop.xlane.xlu0 %63
  %v65 = vsel %vm27, %v57, 0.0
  %66 = vadd.xlane.f32.xlu0 %v65
  %v67 = vpop.xlane.xlu0 %66
  %v68 = vsel %vm27, %v58, 0.0
  %69 = vadd.xlane.f32.xlu0 %v68
  %v70 = vpop.xlane.xlu0 %69
  %v71 = vmul.f32 %v61, %v46
  %v72 = vmul.f32 %v64, %v46
  %v73 = vmul.f32 %v67, %v46
  %v74 = vmul.f32 %v70, %v46
  %v75 = vadd.f32 %v71, 1e-05
  %v76 = vadd.f32 %v72, 1e-05
  %v77 = vadd.f32 %v73, 1e-05
  %v78 = vadd.f32 %v74, 1e-05
  %v79 = vrsqrt.pop %v75
  %v80 = vmul.f32 %v79, %v75
  %v81 = vmul.f32 %v80, %v79
  %v82 = vmul.f32 0.5, %v81
  %v83 = vsub.f32 1.5, %v82
  %v84 = vmul.f32 %v79, %v83
  %vm85 = vweird.f32 %v75
  %vm86 = vweird.f32 %v79
  %vm87 = vmor %vm85, %vm86
  %v88 = vsel %vm87, %v79, %v84
  %v89 = vrsqrt.pop %v76
  %v90 = vmul.f32 %v89, %v76
  %v91 = vmul.f32 %v90, %v89
  %v92 = vmul.f32 0.5, %v91
  %v93 = vsub.f32 1.5, %v92
  %v94 = vmul.f32 %v89, %v93
  %vm95 = vweird.f32 %v76
  %vm96 = vweird.f32 %v89
  %vm97 = vmor %vm95, %vm96
  %v98 = vsel %vm97, %v89, %v94
  %v99 = vrsqrt.pop %v77
  %v100 = vmul.f32 %v99, %v77
  %v101 = vmul.f32 %v100, %v99
  %v102 = vmul.f32 0.5, %v101
  %v103 = vsub.f32 1.5, %v102
  %v104 = vmul.f32 %v99, %v103
  %vm105 = vweird.f32 %v77
  %vm106 = vweird.f32 %v99
  %vm107 = vmor %vm105, %vm106
  %v108 = vsel %vm107, %v99, %v104
  %v109 = vrsqrt.pop %v78
  %v110 = vmul.f32 %v109, %v78
  %v111 = vmul.f32 %v110, %v109
  %v112 = vmul.f32 0.5, %v111
  %v113 = vsub.f32 1.5, %v112
  %v114 = vmul.f32 %v109, %v113
  %vm115 = vweird.f32 %v78
  %vm116 = vweird.f32 %v109
  %vm117 = vmor %vm115, %vm116
  %v118 = vsel %vm117, %v109, %v114
  %v119 = vmul.f32 %v51, %v88
  %v120 = vmul.f32 %v52, %v98
  %v121 = vmul.f32 %v53, %v108
  %v122 = vmul.f32 %v54, %v118
  %v123 = vld [vmem:[%s1] sm:$0x1]
  %v125 = vperm.slane %v123, 0
  %v127 = vmul.f32 %v119, %v125
  %v128 = vmul.f32 %v120, %v125
  %v129 = vmul.f32 %v121, %v125
  %v130 = vmul.f32 %v122, %v125
  %v131 = vld [vmem:[%s2] sm:$0x1]
  %v133 = vperm.slane %v131, 0
  %v135 = vadd.f32 %v127, %v133
  %v136 = vadd.f32 %v128, %v133
  %v137 = vadd.f32 %v129, %v133
  %v138 = vadd.f32 %v130, %v133
  %v139 = vpack.c.bf16 %v136, %v135
  %v140 = vpack.c.bf16 %v138, %v137
  %v141 = vld [vmem:[%s3] sm:$0xf]
  %v142 = vld [vmem:[%s3 + $0x4] sm:$0xf]
  %v143 = vld [vmem:[%s3 + $0x8] sm:$0xf]
  %v144 = vld [vmem:[%s3 + $0xc] sm:$0xf]
  %v149 = vunpack.c.l.b16 %v141
  %v150 = vunpack.c.l.b16 %v142
  %v151 = vunpack.c.l.b16 %v143
  %v152 = vunpack.c.l.b16 %v144
  %v153 = vpack.c.b16 %v150, %v149
  %v154 = vpack.c.b16 %v152, %v151
  %v158 = vsel %vm27, %v139, 0
  %v161 = vsel %vm27, %v140, 0
  %163 = vmatpush.bf16.msra.mxu0 0
  %164 = vmatpush.bf16.msra.mxu0 0
  %165 = vmatpush.bf16.msra.mxu0 0
  %166 = vmatpush.bf16.msra.mxu0 0
  %167 = vmatpush.bf16.msra.mxu0 0
  %168 = vmatpush.bf16.msra.mxu0 0
  %169 = vmatpush.bf16.msra.mxu0 %v154
  %170 = vmatpush.bf16.msra.mxu0 %v153
  %171 = vmatmul.bf16.gmra.mxu0 %v158
  %v172 = vpop.f32.mrf.mxu0
  %v173 = vadd.f32 0.0, %v172
  %v174 = vpop.f32.mrf.mxu0
  %v175 = vadd.f32 0.0, %v174
  %176 = vmatmul.bf16.gmra.mxu0 %v161
  %v177 = vpop.f32.mrf.mxu0
  %v178 = vadd.f32 0.0, %v177
  %v179 = vpop.f32.mrf.mxu0
  %v180 = vadd.f32 0.0, %v179
  %181 = vdwg.mxu0
  %vm182 = vcmask 523264
  %183 = vst.msk [vmem:[%s5] sm:$0xff] %vm182, %v173
  %184 = vst.msk [vmem:[%s5 + $0x8] sm:$0xff] %vm182, %v175
  %185 = vst.msk [vmem:[%s5 + $0x10] sm:$0xff] %vm182, %v178
  %186 = vst.msk [vmem:[%s5 + $0x18] sm:$0xff] %vm182, %v180
  %v187 = vld [vmem:[%s4] sm:$0xf]
  %v188 = vld [vmem:[%s4 + $0x4] sm:$0xf]
  %v189 = vld [vmem:[%s4 + $0x8] sm:$0xf]
  %v190 = vld [vmem:[%s4 + $0xc] sm:$0xf]
  %v195 = vunpack.c.l.b16 %v187
  %v196 = vunpack.c.l.b16 %v188
  %v197 = vunpack.c.l.b16 %v189
  %v198 = vunpack.c.l.b16 %v190
  %v199 = vpack.c.b16 %v196, %v195
  %v200 = vpack.c.b16 %v198, %v197
  %203 = vmatpush.bf16.msra.mxu0 0
  %204 = vmatpush.bf16.msra.mxu0 0
  %205 = vmatpush.bf16.msra.mxu0 0
  %206 = vmatpush.bf16.msra.mxu0 0
  %207 = vmatpush.bf16.msra.mxu0 0
  %208 = vmatpush.bf16.msra.mxu0 0
  %209 = vmatpush.bf16.msra.mxu0 %v200
  %210 = vmatpush.bf16.msra.mxu0 %v199
  %211 = vmatmul.bf16.gmra.mxu0 %v158
  %v212 = vpop.f32.mrf.mxu0
  %v213 = vadd.f32 0.0, %v212
  %v214 = vpop.f32.mrf.mxu0
  %v215 = vadd.f32 0.0, %v214
  %216 = vmatmul.bf16.gmra.mxu0 %v161
  %v217 = vpop.f32.mrf.mxu0
  %v218 = vadd.f32 0.0, %v217
  %v219 = vpop.f32.mrf.mxu0
  %v220 = vadd.f32 0.0, %v219
  %221 = vdwg.mxu0
  %222 = vst.msk [vmem:[%s6] sm:$0xff] %vm182, %v213
  %223 = vst.msk [vmem:[%s6 + $0x8] sm:$0xff] %vm182, %v215
  %224 = vst.msk [vmem:[%s6 + $0x10] sm:$0xff] %vm182, %v218
  %225 = vst.msk [vmem:[%s6 + $0x18] sm:$0xff] %vm182, %v220
  // Predicated region
  $region22: #{condition_modulation_block.5} parent=0 // pred_check
    _
  $region23: #{condition_modulation_block.5} parent=0 // pred_check_branch
    %227 = sbr.rel (0) target = $region25
  $region24: #{condition_modulation_block.5} parent=0 // pred_region
    _
  $region25: #{condition_modulation_block.5} parent=0 // pred_fallthru
    _
  // Predicated region
  $region26: #{condition_modulation_block.5} parent=0 // pred_check
    _
  $region27: #{condition_modulation_block.5} parent=0 // pred_check_branch
    %229 = sbr.rel (0) target = $region29
  $region28: #{condition_modulation_block.5} parent=0 // pred_region
    _
  $region29: #{condition_modulation_block.5} parent=0 // pred_fallthru
    _
  // Predicated region
  $region30: #{condition_modulation_block.5} parent=0 // pred_check
    _
  $region31: #{condition_modulation_block.5} parent=0 // pred_check_branch
    %231 = sbr.rel (0) target = $region33
  $region32: #{condition_modulation_block.5} parent=0 // pred_region
    _
  $region33: #{condition_modulation_block.5} parent=0 // pred_fallthru
    _
  // Predicated region
  $region34: #{condition_modulation_block.5} parent=0 // pred_check
    _
  $region35: #{condition_modulation_block.5} parent=0 // pred_check_branch
    %233 = sbr.rel (0) target = $region37
  $region36: #{condition_modulation_block.5} parent=0 // pred_region
    _
  $region37: #{condition_modulation_block.5} parent=0 // pred_fallthru
    _

// kernel: condition_modulation_block.7
$region0: #{condition_modulation_block.7}
  #allocation0 [shape = 'u32[]', space=smem, size = 0x4, offset = 0x4, fixed_abs, tag = 'smem constant byte address 0x4 - core index']
  #allocation1 [shape = 'u32[72,128]{1,0:T(1,128)}', space=vmem, size = 0x9000, scoped, tag = 'internal scratch']
  #allocation2 [shape = 'f32[16,64]{1,0:T(8,128)}', space=vmem, size = 0x2000, scoped, tag = 'scratch operand']
  %s0 = inlined_call_operand.vmem [shape: f32[2,16,64], index: 0, kind: input, shape index: {}]
  %s1 = inlined_call_operand.vmem [shape: f32[2,16,64], index: 1, kind: input, shape index: {}]
  %s2 = inlined_call_operand.vmem [shape: f32[2,2,32,8], index: 2, kind: input, shape index: {}]
  %s3 = inlined_call_operand.vmem [shape: bf16[64,2], index: 3, kind: input, shape index: {}]
  %s4 = inlined_call_operand.vmem [shape: bf16[2,64], index: 4, kind: input, shape index: {}]
  %s5 = inlined_call_operand.vmem [shape: f32[1,64], index: 5, kind: input, shape index: {}]
  %s6 = inlined_call_operand.vmem [shape: f32[16,64], index: 6, kind: input, shape index: {}]
  %s7 = inlined_call_operand.vmem [shape: f32[1,64], index: 7, kind: input, shape index: {}]
  %s8 = inlined_call_operand.vmem [shape: bf16[64,32], index: 8, kind: input, shape index: {}]
  %s9 = inlined_call_operand.hbm [shape: f32[2,16,32], index: 9, kind: output, shape index: {}]
  %s10 = sld [smem:[#allocation0]]
  $region73: #{condition_modulation_block.7} parent=0
    _
  %s12 = ssub.s32 1, %s10
  %s13 = scalar_select 0, %s12, %s10
  $region1: #{condition_modulation_block.7} parent=0
    #allocation3 [shape = 'u8[8192]{0}', space=vmem, size = 0x2000, scoped, tag = 'output window, operand 0']
    #allocation4 [shape = 's32[2]{0}', space=sflag, size = 0x8, scoped, tag = 'scoped memory for condition_modulation_block.7']
    %14 = vsyncpa [#allocation4], 0
    %s15 = scalar_lea.sflag [#allocation4], 1
    %16 = vsyncpa %s15, 0
    loop: start=0, step=1, limit=6
    $region2: #{condition_modulation_block.7} parent=1 // loop_pre_header
      _
    $region3: #{condition_modulation_block.7} parent=1 // loop_header
      %s18 = sphi 0, %s22
      %p19 = scmp.ge.s32.totalorder %s18, 6
      %s25 = sphi 0, %s37
      %s26 = sphi 0, %s33
      %s27 = sphi 0, %s25
      %s28 = sphi 0, %s26
      %s29 = sphi 0, %s27
      %s30 = sphi 0, %s28
      %s42 = sphi 0, %s44
      %s45 = sphi 0, %s42
      %s46 = sphi 0, %s45
      %s62 = sphi 0, %s46
      %s70 = sphi 0, %s72
      %s73 = sphi 0, %s70
      %s74 = sphi 0, %s73
      %s90 = sphi 0, %s74
      %s98 = sphi 0, %s100
      %s101 = sphi 0, %s98
      %s102 = sphi 0, %s101
      %s118 = sphi 0, %s102
      %s122 = sphi 0, %s122
      %s124 = sphi 0, %s122
      %s125 = sphi 0, %s124
      %s139 = sphi 0, %s125
      %s143 = sphi 0, %s143
      %s145 = sphi 0, %s143
      %s146 = sphi 0, %s145
      %s160 = sphi 0, %s146
      %s164 = sphi 0, %s164
      %s166 = sphi 0, %s164
      %s167 = sphi 0, %s166
      %s181 = sphi 0, %s167
      %s185 = sphi 0, %s185
      %s187 = sphi 0, %s185
      %s188 = sphi 0, %s187
      %s202 = sphi 0, %s188
      %s206 = sphi 0, %s206
      %s208 = sphi 0, %s206
      %s209 = sphi 0, %s208
      %s223 = sphi 0, %s209
      %s227 = sphi 0, %s227
      %s229 = sphi 0, %s227
      %s230 = sphi 0, %s229
      %s244 = sphi 0, %s230
      %s252 = sphi 0, %s254
      %s255 = sphi 0, %s252
      %s256 = sphi 0, %s255
      %s272 = sphi 0, %s256
    $region4: #{condition_modulation_block.7} parent=1 // loop_header_branch
      %21 = sbr.rel (%p19) target = $region8
    $region5: #{condition_modulation_block.7} parent=1 // loop_body
      %s23 = ssub.s32 %s18, 1
      %s24 = ssub.s32 %s18, 2
      %s31 = sadd.s32 1, %s26
      %p32 = scmp.ge.s32.totalorder %s31, 2
      %s33 = scalar_select %p32, 0, %s31
      %s34 = sadd.s32 1, %s25
      %s35 = scalar_select %p32, %s34, %s25
      %p36 = scmp.ge.s32.totalorder %s35, 2
      %s37 = scalar_select %p36, 0, %s35
      %s38 = ssub.s32 %s25, %s37
      %s39 = ssub.s32 %s26, %s33
      %s40 = sor.u32 %s38, %s39
      %p41 = scmp.eq.s32.totalorder %s40, 0
      %s43 = sadd.s32 %s42, 1
      %s44 = scalar_select %p41, %s42, %s43
      %p47 = pneg %p41
      %p48 = scmp.eq.s32.totalorder %s18, 3
      %p49 = por %p47, %p48
      %p50 = scmp.ne.s32.totalorder %s42, %s45
      %p51 = scmp.eq.s32.totalorder %s18, 0
      %p52 = por %p50, %p51
      %p53 = scmp.ne.s32.totalorder %s42, %s45
      %p54 = scmp.eq.s32.totalorder %s23, 3
      %p55 = por %p53, %p54
      %p56 = scmp.ne.s32.totalorder %s45, %s46
      %p57 = scmp.eq.s32.totalorder %s23, 0
      %p58 = por %p56, %p57
      %p59 = scmp.ne.s32.totalorder %s45, %s46
      %p60 = scmp.eq.s32.totalorder %s24, 3
      %p61 = por %p59, %p60
      %p63 = scmp.ne.s32.totalorder %s46, %s62
      %p64 = scmp.eq.s32.totalorder %s24, 0
      %p65 = por %p63, %p64
      %s66 = ssub.s32 %s25, %s37
      %s67 = ssub.s32 %s26, %s33
      %s68 = sor.u32 %s66, %s67
      %p69 = scmp.eq.s32.totalorder %s68, 0
      %s71 = sadd.s32 %s70, 1
      %s72 = scalar_select %p69, %s70, %s71
      %p75 = pneg %p69
      %p76 = scmp.eq.s32.totalorder %s18, 3
      %p77 = por %p75, %p76
      %p78 = scmp.ne.s32.totalorder %s70, %s73
      %p79 = scmp.eq.s32.totalorder %s18, 0
      %p80 = por %p78, %p79
      %p81 = scmp.ne.s32.totalorder %s70, %s73
      %p82 = scmp.eq.s32.totalorder %s23, 3
      %p83 = por %p81, %p82
      %p84 = scmp.ne.s32.totalorder %s73, %s74
      %p85 = scmp.eq.s32.totalorder %s23, 0
      %p86 = por %p84, %p85
      %p87 = scmp.ne.s32.totalorder %s73, %s74
      %p88 = scmp.eq.s32.totalorder %s24, 3
      %p89 = por %p87, %p88
      %p91 = scmp.ne.s32.totalorder %s74, %s90
      %p92 = scmp.eq.s32.totalorder %s24, 0
      %p93 = por %p91, %p92
      %s94 = ssub.s32 %s25, %s37
      %s95 = ssub.s32 %s26, %s33
      %s96 = sor.u32 %s94, %s95
      %p97 = scmp.eq.s32.totalorder %s96, 0
      %s99 = sadd.s32 %s98, 1
      %s100 = scalar_select %p97, %s98, %s99
      %p103 = pneg %p97
      %p104 = scmp.eq.s32.totalorder %s18, 3
      %p105 = por %p103, %p104
      %p106 = scmp.ne.s32.totalorder %s98, %s101
      %p107 = scmp.eq.s32.totalorder %s18, 0
      %p108 = por %p106, %p107
      %p109 = scmp.ne.s32.totalorder %s98, %s101
      %p110 = scmp.eq.s32.totalorder %s23, 3
      %p111 = por %p109, %p110
      %p112 = scmp.ne.s32.totalorder %s101, %s102
      %p113 = scmp.eq.s32.totalorder %s23, 0
      %p114 = por %p112, %p113
      %p115 = scmp.ne.s32.totalorder %s101, %s102
      %p116 = scmp.eq.s32.totalorder %s24, 3
      %p117 = por %p115, %p116
      %p119 = scmp.ne.s32.totalorder %s102, %s118
      %p120 = scmp.eq.s32.totalorder %s24, 0
      %p121 = por %p119, %p120
      %s123 = sadd.s32 %s122, 1
      %p126 = scmp.eq.s32.totalorder %s18, 3
      %p127 = scmp.ne.s32.totalorder %s122, %s124
      %p128 = scmp.eq.s32.totalorder %s18, 0
      %p129 = por %p127, %p128
      %p130 = scmp.ne.s32.totalorder %s122, %s124
      %p131 = scmp.eq.s32.totalorder %s23, 3
      %p132 = por %p130, %p131
      %p133 = scmp.ne.s32.totalorder %s124, %s125
      %p134 = scmp.eq.s32.totalorder %s23, 0
      %p135 = por %p133, %p134
      %p136 = scmp.ne.s32.totalorder %s124, %s125
      %p137 = scmp.eq.s32.totalorder %s24, 3
      %p138 = por %p136, %p137
      %p140 = scmp.ne.s32.totalorder %s125, %s139
      %p141 = scmp.eq.s32.totalorder %s24, 0
      %p142 = por %p140, %p141
      %s144 = sadd.s32 %s143, 1
      %p147 = scmp.eq.s32.totalorder %s18, 3
      %p148 = scmp.ne.s32.totalorder %s143, %s145
      %p149 = scmp.eq.s32.totalorder %s18, 0
      %p150 = por %p148, %p149
      %p151 = scmp.ne.s32.totalorder %s143, %s145
      %p152 = scmp.eq.s32.totalorder %s23, 3
      %p153 = por %p151, %p152
      %p154 = scmp.ne.s32.totalorder %s145, %s146
      %p155 = scmp.eq.s32.totalorder %s23, 0
      %p156 = por %p154, %p155
      %p157 = scmp.ne.s32.totalorder %s145, %s146
      %p158 = scmp.eq.s32.totalorder %s24, 3
      %p159 = por %p157, %p158
      %p161 = scmp.ne.s32.totalorder %s146, %s160
      %p162 = scmp.eq.s32.totalorder %s24, 0
      %p163 = por %p161, %p162
      %s165 = sadd.s32 %s164, 1
      %p168 = scmp.eq.s32.totalorder %s18, 3
      %p169 = scmp.ne.s32.totalorder %s164, %s166
      %p170 = scmp.eq.s32.totalorder %s18, 0
      %p171 = por %p169, %p170
      %p172 = scmp.ne.s32.totalorder %s164, %s166
      %p173 = scmp.eq.s32.totalorder %s23, 3
      %p174 = por %p172, %p173
      %p175 = scmp.ne.s32.totalorder %s166, %s167
      %p176 = scmp.eq.s32.totalorder %s23, 0
      %p177 = por %p175, %p176
      %p178 = scmp.ne.s32.totalorder %s166, %s167
      %p179 = scmp.eq.s32.totalorder %s24, 3
      %p180 = por %p178, %p179
      %p182 = scmp.ne.s32.totalorder %s167, %s181
      %p183 = scmp.eq.s32.totalorder %s24, 0
      %p184 = por %p182, %p183
      %s186 = sadd.s32 %s185, 1
      %p189 = scmp.eq.s32.totalorder %s18, 3
      %p190 = scmp.ne.s32.totalorder %s185, %s187
      %p191 = scmp.eq.s32.totalorder %s18, 0
      %p192 = por %p190, %p191
      %p193 = scmp.ne.s32.totalorder %s185, %s187
      %p194 = scmp.eq.s32.totalorder %s23, 3
      %p195 = por %p193, %p194
      %p196 = scmp.ne.s32.totalorder %s187, %s188
      %p197 = scmp.eq.s32.totalorder %s23, 0
      %p198 = por %p196, %p197
      %p199 = scmp.ne.s32.totalorder %s187, %s188
      %p200 = scmp.eq.s32.totalorder %s24, 3
      %p201 = por %p199, %p200
      %p203 = scmp.ne.s32.totalorder %s188, %s202
      %p204 = scmp.eq.s32.totalorder %s24, 0
      %p205 = por %p203, %p204
      %s207 = sadd.s32 %s206, 1
      %p210 = scmp.eq.s32.totalorder %s18, 3
      %p211 = scmp.ne.s32.totalorder %s206, %s208
      %p212 = scmp.eq.s32.totalorder %s18, 0
      %p213 = por %p211, %p212
      %p214 = scmp.ne.s32.totalorder %s206, %s208
      %p215 = scmp.eq.s32.totalorder %s23, 3
      %p216 = por %p214, %p215
      %p217 = scmp.ne.s32.totalorder %s208, %s209
      %p218 = scmp.eq.s32.totalorder %s23, 0
      %p219 = por %p217, %p218
      %p220 = scmp.ne.s32.totalorder %s208, %s209
      %p221 = scmp.eq.s32.totalorder %s24, 3
      %p222 = por %p220, %p221
      %p224 = scmp.ne.s32.totalorder %s209, %s223
      %p225 = scmp.eq.s32.totalorder %s24, 0
      %p226 = por %p224, %p225
      %s228 = sadd.s32 %s227, 1
      %p231 = scmp.eq.s32.totalorder %s18, 3
      %p232 = scmp.ne.s32.totalorder %s227, %s229
      %p233 = scmp.eq.s32.totalorder %s18, 0
      %p234 = por %p232, %p233
      %p235 = scmp.ne.s32.totalorder %s227, %s229
      %p236 = scmp.eq.s32.totalorder %s23, 3
      %p237 = por %p235, %p236
      %p238 = scmp.ne.s32.totalorder %s229, %s230
      %p239 = scmp.eq.s32.totalorder %s23, 0
      %p240 = por %p238, %p239
      %p241 = scmp.ne.s32.totalorder %s229, %s230
      %p242 = scmp.eq.s32.totalorder %s24, 3
      %p243 = por %p241, %p242
      %p245 = scmp.ne.s32.totalorder %s230, %s244
      %p246 = scmp.eq.s32.totalorder %s24, 0
      %p247 = por %p245, %p246
      %s248 = ssub.s32 %s25, %s37
      %s249 = ssub.s32 %s26, %s33
      %s250 = sor.u32 %s248, %s249
      %p251 = scmp.eq.s32.totalorder %s250, 0
      %s253 = sadd.s32 %s252, 1
      %s254 = scalar_select %p251, %s252, %s253
      %p257 = pneg %p251
      %p258 = scmp.eq.s32.totalorder %s18, 3
      %p259 = por %p257, %p258
      %p260 = scmp.ne.s32.totalorder %s252, %s255
      %p261 = scmp.eq.s32.totalorder %s18, 0
      %p262 = por %p260, %p261
      %p263 = scmp.ne.s32.totalorder %s252, %s255
      %p264 = scmp.eq.s32.totalorder %s23, 3
      %p265 = por %p263, %p264
      %p266 = scmp.ne.s32.totalorder %s255, %s256
      %p267 = scmp.eq.s32.totalorder %s23, 0
      %p268 = por %p266, %p267
      %p269 = scmp.ne.s32.totalorder %s255, %s256
      %p270 = scmp.eq.s32.totalorder %s24, 3
      %p271 = por %p269, %p270
      %p273 = scmp.ne.s32.totalorder %s256, %s272
      %p274 = scmp.eq.s32.totalorder %s24, 0
      %p275 = por %p273, %p274
      %p276 = scmp.le.s32.totalorder 1, %s18
      %p277 = scmp.lt.s32.totalorder %s18, 5
      %p278 = pnand %p276, %p277
      %p279 = pneg %p278
      // Predicated region
      $region9: #{condition_modulation_block.7} parent=5 // pred_check
        _
      $region10: #{condition_modulation_block.7} parent=5 // pred_check_branch
        %281 = sbr.rel (%p278) target = $region12
      $region11: #{condition_modulation_block.7} parent=5 // pred_region
        %s282 = ssub.s32 %s18, 1
        // Predicated region
        $region13: #{condition_modulation_block.7} parent=11 // pred_check
          %p283 = pneg %p135
        $region14: #{condition_modulation_block.7} parent=11 // pred_check_branch
          %285 = sbr.rel (%p283) target = $region16
        $region15: #{condition_modulation_block.7} parent=11 // pred_region
          _
        $region16: #{condition_modulation_block.7} parent=11 // pred_fallthru
          _
        // Predicated region
        $region17: #{condition_modulation_block.7} parent=11 // pred_check
          %p286 = pneg %p156
        $region18: #{condition_modulation_block.7} parent=11 // pred_check_branch
          %288 = sbr.rel (%p286) target = $region20
        $region19: #{condition_modulation_block.7} parent=11 // pred_region
          _
        $region20: #{condition_modulation_block.7} parent=11 // pred_fallthru
          _
        // Predicated region
        $region21: #{condition_modulation_block.7} parent=11 // pred_check
          %p289 = pneg %p177
        $region22: #{condition_modulation_block.7} parent=11 // pred_check_branch
          %291 = sbr.rel (%p289) target = $region24
        $region23: #{condition_modulation_block.7} parent=11 // pred_region
          _
        $region24: #{condition_modulation_block.7} parent=11 // pred_fallthru
          _
        // Predicated region
        $region25: #{condition_modulation_block.7} parent=11 // pred_check
          %p292 = pneg %p198
        $region26: #{condition_modulation_block.7} parent=11 // pred_check_branch
          %294 = sbr.rel (%p292) target = $region28
        $region27: #{condition_modulation_block.7} parent=11 // pred_region
          _
        $region28: #{condition_modulation_block.7} parent=11 // pred_fallthru
          _
        // Predicated region
        $region29: #{condition_modulation_block.7} parent=11 // pred_check
          %p295 = pneg %p219
        $region30: #{condition_modulation_block.7} parent=11 // pred_check_branch
          %297 = sbr.rel (%p295) target = $region32
        $region31: #{condition_modulation_block.7} parent=11 // pred_region
          _
        $region32: #{condition_modulation_block.7} parent=11 // pred_fallthru
          _
        // Predicated region
        $region33: #{condition_modulation_block.7} parent=11 // pred_check
          %p298 = pneg %p240
        $region34: #{condition_modulation_block.7} parent=11 // pred_check_branch
          %300 = sbr.rel (%p298) target = $region36
        $region35: #{condition_modulation_block.7} parent=11 // pred_region
          _
        $region36: #{condition_modulation_block.7} parent=11 // pred_fallthru
          _
      $region12: #{condition_modulation_block.7} parent=5 // pred_fallthru
        _
      %p301 = scmp.lt.s32.totalorder %s18, 4
      // Predicated region
      $region37: #{condition_modulation_block.7} parent=5 // pred_check
        %p302 = pneg %p301
      $region38: #{condition_modulation_block.7} parent=5 // pred_check_branch
        %304 = sbr.rel (%p302) target = $region40
      $region39: #{condition_modulation_block.7} parent=5 // pred_region
        // Predicated region
        $region41: #{condition_modulation_block.7} parent=39 // pred_check
          %p305 = pneg %p52
        $region42: #{condition_modulation_block.7} parent=39 // pred_check_branch
          %307 = sbr.rel (%p305) target = $region44
        $region43: #{condition_modulation_block.7} parent=39 // pred_region
          %p308 = scmp.lt.s32.totalorder %s25, 1
          %s309 = scalar_select %p308, %s25, 1
          %p310 = scmp.lt.s32.totalorder %s26, 1
          %s311 = scalar_select %p310, %s26, 1
          %s312 = smul.addr %s309, 2
          %s313 = sadd.s32 %s311, %s312
          %s314 = smul.addr %s313, 8
          %s315 = scalar_lea.vmem %s0, %s314
        $region44: #{condition_modulation_block.7} parent=39 // pred_fallthru
          _
        // Predicated region
        $region45: #{condition_modulation_block.7} parent=39 // pred_check
          %p316 = pneg %p80
        $region46: #{condition_modulation_block.7} parent=39 // pred_check_branch
          %318 = sbr.rel (%p316) target = $region48
        $region47: #{condition_modulation_block.7} parent=39 // pred_region
          %p319 = scmp.lt.s32.totalorder %s25, 1
          %s320 = scalar_select %p319, %s25, 1
          %p321 = scmp.lt.s32.totalorder %s26, 1
          %s322 = scalar_select %p321, %s26, 1
          %s323 = smul.addr %s320, 2
          %s324 = sadd.s32 %s322, %s323
          %s325 = smul.addr %s324, 8
          %s326 = scalar_lea.vmem %s1, %s325
        $region48: #{condition_modulation_block.7} parent=39 // pred_fallthru
          _
        // Predicated region
        $region49: #{condition_modulation_block.7} parent=39 // pred_check
          %p327 = pneg %p108
        $region50: #{condition_modulation_block.7} parent=39 // pred_check_branch
          %329 = sbr.rel (%p327) target = $region52
        $region51: #{condition_modulation_block.7} parent=39 // pred_region
          %p330 = scmp.lt.s32.totalorder %s25, 1
          %s331 = scalar_select %p330, %s25, 1
          %p332 = scmp.lt.s32.totalorder %s26, 1
          %s333 = scalar_select %p332, %s26, 1
          %s334 = smul.addr %s333, 4
          %s335 = smul.addr %s331, 8
          %s336 = sadd.s32 %s334, %s335
          %s337 = smul.addr %s336, 8
          %s338 = scalar_lea.vmem %s2, %s337
        $region52: #{condition_modulation_block.7} parent=39 // pred_fallthru
          _
      $region40: #{condition_modulation_block.7} parent=5 // pred_fallthru
        _
      %p339 = scmp.le.s32.totalorder 1, %s18
      %p340 = scmp.lt.s32.totalorder %s18, 5
      %p341 = pnand %p339, %p340
      %p342 = pneg %p341
      // Predicated region
      $region53: #{condition_modulation_block.7} parent=5 // pred_check
        _
      $region54: #{condition_modulation_block.7} parent=5 // pred_check_branch
        %344 = sbr.rel (%p341) target = $region56
      $region55: #{condition_modulation_block.7} parent=5 // pred_region
        %s345 = ssub.s32 %s18, 1
        %p346 = scmp.lt.s32.totalorder %s27, 1
        %s347 = scalar_select %p346, %s27, 1
        %p348 = scmp.lt.s32.totalorder %s28, 1
        %s349 = scalar_select %p348, %s28, 1
        %s350 = smul.addr %s347, 2
        %s351 = sadd.s32 %s349, %s350
        %s352 = smul.addr %s351, 8
        %s353 = scalar_lea.vmem %s0, %s352
        %p354 = pneg %p58
        %p355 = pneg %p55
        %p356 = scmp.lt.s32.totalorder %s27, 1
        %s357 = scalar_select %p356, %s27, 1
        %p358 = scmp.lt.s32.totalorder %s28, 1
        %s359 = scalar_select %p358, %s28, 1
        %s360 = smul.addr %s357, 2
        %s361 = sadd.s32 %s359, %s360
        %s362 = smul.addr %s361, 8
        %s363 = scalar_lea.vmem %s1, %s362
        %p364 = pneg %p86
        %p365 = pneg %p83
        %p366 = scmp.lt.s32.totalorder %s27, 1
        %s367 = scalar_select %p366, %s27, 1
        %p368 = scmp.lt.s32.totalorder %s28, 1
        %s369 = scalar_select %p368, %s28, 1
        %s370 = smul.addr %s369, 4
        %s371 = smul.addr %s367, 8
        %s372 = sadd.s32 %s370, %s371
        %s373 = smul.addr %s372, 8
        %s374 = scalar_lea.vmem %s2, %s373
        %p375 = pneg %p114
        %p376 = pneg %p111
        %p377 = pneg %p135
        %p378 = pneg %p132
        %p379 = pneg %p156
        %p380 = pneg %p153
        %p381 = pneg %p177
        %p382 = pneg %p174
        %p383 = pneg %p198
        %p384 = pneg %p195
        %p385 = pneg %p219
        %p386 = pneg %p216
        %p387 = pneg %p240
        %p388 = pneg %p237
        %p389 = pneg %p268
        %p390 = pneg %p265
        %s391 = sand.u32 %s255, 1
        %s392 = scalar_lea.sflag [#allocation4], %s391
        %s393 = sand.u32 %s255, 1
        %s394 = smul.addr %s393, 8
        %s395 = scalar_lea.vmem [#allocation3], %s394
        %p396 = scmp.lt.s32.totalorder %s27, 1
        %s397 = scalar_select %p396, %s27, 1
        %p398 = scmp.lt.s32.totalorder %s28, 1
        %s399 = scalar_select %p398, %s28, 1
        %s400 = smul.addr %s397, 2
        %s401 = sadd.s32 %s399, %s400
        %s402 = smul.addr %s401, 8
        %s403 = scalar_lea.vmem %s0, %s402
        %p404 = scmp.lt.s32.totalorder %s27, 1
        %s405 = scalar_select %p404, %s27, 1
        %p406 = scmp.lt.s32.totalorder %s28, 1
        %s407 = scalar_select %p406, %s28, 1
        %s408 = smul.addr %s405, 2
        %s409 = sadd.s32 %s407, %s408
        %s410 = smul.addr %s409, 8
        %s411 = scalar_lea.vmem %s1, %s410
        %p412 = scmp.lt.s32.totalorder %s27, 1
        %s413 = scalar_select %p412, %s27, 1
        %p414 = scmp.lt.s32.totalorder %s28, 1
        %s415 = scalar_select %p414, %s28, 1
        %s416 = smul.addr %s415, 4
        %s417 = smul.addr %s413, 8
        %s418 = sadd.s32 %s416, %s417
        %s419 = smul.addr %s418, 8
        %s420 = scalar_lea.vmem %s2, %s419
        %p422 = scmp.eq.s32.totalorder %s28, 0
        // Predicated region
        $region57: #{condition_modulation_block.7} parent=55 // pred_check
          %p423 = pneg %p422
        $region58: #{condition_modulation_block.7} parent=55 // pred_check_branch
          %425 = sbr.rel (%p423) target = $region60
        $region59: #{condition_modulation_block.7} parent=55 // pred_region
          %vm426 = vcmask 523264
          %427 = vst.msk [vmem:[#allocation2] sm:$0xff] %vm426, 0.0
          %428 = vst.msk [vmem:[#allocation2 + $0x8] sm:$0xff] %vm426, 0.0
        $region60: #{condition_modulation_block.7} parent=55 // pred_fallthru
          _
        %v429 = vld [vmem:[%s403] sm:$0xff]
        %v430 = vld [vmem:[%s411] sm:$0xff]
        %v431 = vld [vmem:[%s420] sm:$0xff]
        %v432 = vld [vmem:[%s420 + $0x8] sm:$0xff]
        %v433 = vld [vmem:[%s420 + $0x10] sm:$0xff]
        %v434 = vld [vmem:[%s420 + $0x18] sm:$0xff]
        %v435 = vpack.c.bf16 %v429, %v429
        %v436 = vld [vmem:[%s3] sm:$0xf]
        %v437 = vld [vmem:[%s3 + $0x4] sm:$0xf]
        %v438 = vld [vmem:[%s3 + $0x8] sm:$0xf]
        %v439 = vld [vmem:[%s3 + $0xc] sm:$0xf]
        %v440 = vld [vmem:[%s3 + $0x10] sm:$0xf]
        %v441 = vld [vmem:[%s3 + $0x14] sm:$0xf]
        %v442 = vld [vmem:[%s3 + $0x18] sm:$0xf]
        %v443 = vld [vmem:[%s3 + $0x1c] sm:$0xf]
        %v452 = vunpack.c.l.b16 %v436
        %v453 = vunpack.c.l.b16 %v437
        %v454 = vunpack.c.l.b16 %v438
        %v455 = vunpack.c.l.b16 %v439
        %v456 = vunpack.c.l.b16 %v440
        %v457 = vunpack.c.l.b16 %v441
        %v458 = vunpack.c.l.b16 %v442
        %v459 = vunpack.c.l.b16 %v443
        %v460 = vpack.c.b16 %v453, %v452
        %v461 = vpack.c.b16 %v455, %v454
        %v462 = vpack.c.b16 %v457, %v456
        %v463 = vpack.c.b16 %v459, %v458
        %vm468 = vcmask 523264
        %v470 = vsel %vm468, %v435, 0
        %472 = vmatpush.bf16.msra.mxu0 0
        %473 = vmatpush.bf16.msra.mxu0 0
        %474 = vmatpush.bf16.msra.mxu0 0
        %475 = vmatpush.bf16.msra.mxu0 0
        %476 = vmatpush.bf16.msra.mxu0 %v463
        %477 = vmatpush.bf16.msra.mxu0 %v462
        %478 = vmatpush.bf16.msra.mxu0 %v461
        %479 = vmatpush.bf16.msra.mxu0 %v460
        %480 = vmatmul.bf16.gmra.mxu0 %v470
        %v481 = vpop.f32.mrf.mxu0
        %v482 = vadd.f32 0.0, %v481
        %v483 = vpop.f32.mrf.mxu0
        %484 = vdwg.mxu0
        %v485 = vpack.c.bf16 %v482, %v482
        %v486 = vld [vmem:[%s4] sm:$0x1]
        %v487 = vld [vmem:[%s5] sm:$0x1]
        %v489 = vperm.slane %v487, 0
        %vm491 = vcmask 15360
        %v493 = vsel %vm491, %v485, 0
        %vm495 = vcmask 1040384
        %v497 = vsel %vm495, %v486, 0
        %499 = vmatpush.bf16.msra.mxu0 0
        %500 = vmatpush.bf16.msra.mxu0 0
        %501 = vmatpush.bf16.msra.mxu0 0
        %502 = vmatpush.bf16.msra.mxu0 0
        %503 = vmatpush.bf16.msra.mxu0 0
        %504 = vmatpush.bf16.msra.mxu0 0
        %505 = vmatpush.bf16.msra.mxu0 0
        %506 = vmatpush.bf16.msra.mxu0 %v497
        %507 = vmatmul.bf16.gmra.mxu0 %v493
        %v508 = vpop.f32.mrf.mxu0
        %v509 = vadd.f32 %v489, %v508
        %v510 = vpop.f32.mrf.mxu0
        %511 = vdwg.mxu0
        %v512 = vmax.f32 %v509, 0.0
        %vm513 = vcmp.ne.f32.partialorder %v509, %v509
        %v514 = vadd.f32 %v509, 0.0
        %v515 = vand.u32 2147483647, %v509
        %v516 = vsub.f32 0.0, %v515
        %v517 = vmul.f32 %v516, 1.442695
        %v518 = vpow.pop %v517
        %v519 = vadd.f32 %v518, 1.0
        %v520 = vlog2.pop %v519
        %v521 = vmul.f32 %v520, 0.6931472
        %v522 = vmul.f32 -0.5, %v518
        %v523 = vadd.f32 %v522, 1.0
        %v524 = vmul.f32 %v523, %v518
        %v525 = vand.u32 2147483647, %v518
        %vm526 = vcmp.lt.f32.partialorder %v525, 0.0004427343
        %v527 = vsel %vm526, %v524, %v521
        %v528 = vadd.f32 %v512, %v527
        %v529 = vsel %vm513, %v514, %v528
        %v530 = vmul.f32 %v529, %v429
        %v531 = vxor.u32 %v430, 2147483648
        %v532 = vmul.f32 %v531, 1.442695
        %v533 = vpow.pop %v532
        %v534 = vadd.f32 %v533, 1.0
        %v535 = vrcp.pop %v534
        %v536 = vmul.f32 %v534, %v535
        %v537 = vsub.f32 1.0, %v536
        %v538 = vmul.f32 %v535, %v537
        %v539 = vadd.f32 %v535, %v538
        %vm540 = vweird.f32 %v534
        %vm541 = vweird.f32 %v535
        %vm542 = vmor %vm540, %vm541
        %v543 = vsel %vm542, %v535, %v539
        %v544 = vand.u32 2147483647, %v534
        %vm545 = vcmp.eq.f32.partialorder %v544, 8.507059e+37
        %v546 = vand.u32 %v534, 2147483648
        %v547 = vor.u32 1.1754944e-38, %v546
        %v548 = vsel %vm545, %v547, %v543
        %v549 = vmul.f32 1.0, %v548
        %v550 = vmul.f32 %v430, %v549
        %v551 = vld [vmem:[%s6] sm:$0xff]
        %v552 = vld [vmem:[%s6 + $0x8] sm:$0xff]
        %v553 = vld [vmem:[#allocation2] sm:$0xff]
        %v554 = vld [vmem:[#allocation2 + $0x8] sm:$0xff]
        %v555 = vperm.slane %v529, 0
        %v556 = vmul.f32 %v555, %v551
        %v557 = vmul.f32 %v555, %v552
        %v558 = vmul.f32 %v556, 1.442695
        %v559 = vpow.pop %v558
        %v560 = vmul.f32 %v557, 1.442695
        %v561 = vpow.pop %v560
        %v562 = vmul.f32 %v559, %v553
        %v563 = vmul.f32 %v561, %v554
        %565 = vset.pattern.permute.xlu0 0
        %566 = vperm.xlu0 %565, %v431
        %v567 = vpop.permute.xlu0 %566
        %570 = vset.pattern.permute.xlu0 0
        %571 = vperm.xlu0 %570, %v432
        %v572 = vpop.permute.xlu0 %571
        %v574 = vperm.slane %v530, 0
        %v575 = vmul.f32 %v567, %v574
        %v576 = vmul.f32 %v572, %v574
        %v577 = vadd.f32 %v562, %v575
        %v578 = vadd.f32 %v563, %v576
        %580 = vset.pattern.permute.xlu0 0
        %581 = vperm.xlu0 %580, %v433
        %v582 = vpop.permute.xlu0 %581
        %585 = vset.pattern.permute.xlu0 0
        %586 = vperm.xlu0 %585, %v434
        %v587 = vpop.permute.xlu0 %586
        %v589 = vmul.f32 %v577, %v582
        %v590 = vmul.f32 %v578, %v587
        %v591 = vsel %vm468, %v589, 0.0
        %v592 = vsel %vm468, %v590, 0.0
        %v593 = vadd.f32 %v591, %v592
        %v594 = vrot.slane %v593, 4
        %v595 = vadd.f32 %v593, %v594
        %v596 = vrot.slane %v595, 2
        %v597 = vadd.f32 %v595, %v596
        %v598 = vrot.slane %v597, 1
        %v599 = vadd.f32 %v597, %v598
        %v600 = vperm.slane %v529, 1
        %v601 = vmul.f32 %v600, %v551
        %v602 = vmul.f32 %v600, %v552
        %v603 = vmul.f32 %v601, 1.442695
        %v604 = vpow.pop %v603
        %v605 = vmul.f32 %v602, 1.442695
        %v606 = vpow.pop %v605
        %v607 = vmul.f32 %v604, %v577
        %v608 = vmul.f32 %v606, %v578
        %609 = vset.pattern.permute.xlu0 1
        %610 = vperm.xlu0 %609, %v431
        %v611 = vpop.permute.xlu0 %610
        %613 = vset.pattern.permute.xlu0 1
        %614 = vperm.xlu0 %613, %v432
        %v615 = vpop.permute.xlu0 %614
        %v617 = vperm.slane %v530, 1
        %v618 = vmul.f32 %v611, %v617
        %v619 = vmul.f32 %v615, %v617
        %v620 = vadd.f32 %v607, %v618
        %v621 = vadd.f32 %v608, %v619
        %622 = vset.pattern.permute.xlu0 1
        %623 = vperm.xlu0 %622, %v433
        %v624 = vpop.permute.xlu0 %623
        %626 = vset.pattern.permute.xlu0 1
        %627 = vperm.xlu0 %626, %v434
        %v628 = vpop.permute.xlu0 %627
        %v630 = vmul.f32 %v620, %v624
        %v631 = vmul.f32 %v621, %v628
        %v632 = vsel %vm468, %v630, 0.0
        %v633 = vsel %vm468, %v631, 0.0
        %v634 = vadd.f32 %v632, %v633
        %v635 = vrot.slane %v634, 4
        %v636 = vadd.f32 %v634, %v635
        %v637 = vrot.slane %v636, 2
        %v638 = vadd.f32 %v636, %v637
        %v639 = vrot.slane %v638, 1
        %v640 = vadd.f32 %v638, %v639
        %v641 = vperm.slane %v529, 2
        %v642 = vmul.f32 %v641, %v551
        %v643 = vmul.f32 %v641, %v552
        %v644 = vmul.f32 %v642, 1.442695
        %v645 = vpow.pop %v644
        %v646 = vmul.f32 %v643, 1.442695
        %v647 = vpow.pop %v646
        %v648 = vmul.f32 %v645, %v620
        %v649 = vmul.f32 %v647, %v621
        %650 = vset.pattern.permute.xlu0 2
        %651 = vperm.xlu0 %650, %v431
        %v652 = vpop.permute.xlu0 %651
        %654 = vset.pattern.permute.xlu0 2
        %655 = vperm.xlu0 %654, %v432
        %v656 = vpop.permute.xlu0 %655
        %v658 = vperm.slane %v530, 2
        %v659 = vmul.f32 %v652, %v658
        %v660 = vmul.f32 %v656, %v658
        %v661 = vadd.f32 %v648, %v659
        %v662 = vadd.f32 %v649, %v660
        %663 = vset.pattern.permute.xlu0 2
        %664 = vperm.xlu0 %663, %v433
        %v665 = vpop.permute.xlu0 %664
        %667 = vset.pattern.permute.xlu0 2
        %668 = vperm.xlu0 %667, %v434
        %v669 = vpop.permute.xlu0 %668
        %v671 = vmul.f32 %v661, %v665
        %v672 = vmul.f32 %v662, %v669
        %v673 = vsel %vm468, %v671, 0.0
        %v674 = vsel %vm468, %v672, 0.0
        %v675 = vadd.f32 %v673, %v674
        %v676 = vrot.slane %v675, 4
        %v677 = vadd.f32 %v675, %v676
        %v678 = vrot.slane %v677, 2
        %v679 = vadd.f32 %v677, %v678
        %v680 = vrot.slane %v679, 1
        %v681 = vadd.f32 %v679, %v680
        %v682 = vperm.slane %v529, 3
        %v683 = vmul.f32 %v682, %v551
        %v684 = vmul.f32 %v682, %v552
        %v685 = vmul.f32 %v683, 1.442695
        %v686 = vpow.pop %v685
        %v687 = vmul.f32 %v684, 1.442695
        %v688 = vpow.pop %v687
        %v689 = vmul.f32 %v686, %v661
        %v690 = vmul.f32 %v688, %v662
        %691 = vset.pattern.permute.xlu0 3
        %692 = vperm.xlu0 %691, %v431
        %v693 = vpop.permute.xlu0 %692
        %695 = vset.pattern.permute.xlu0 3
        %696 = vperm.xlu0 %695, %v432
        %v697 = vpop.permute.xlu0 %696
        %v699 = vperm.slane %v530, 3
        %v700 = vmul.f32 %v693, %v699
        %v701 = vmul.f32 %v697, %v699
        %v702 = vadd.f32 %v689, %v700
        %v703 = vadd.f32 %v690, %v701
        %704 = vset.pattern.permute.xlu0 3
        %705 = vperm.xlu0 %704, %v433
        %v706 = vpop.permute.xlu0 %705
        %708 = vset.pattern.permute.xlu0 3
        %709 = vperm.xlu0 %708, %v434
        %v710 = vpop.permute.xlu0 %709
        %v712 = vmul.f32 %v702, %v706
        %v713 = vmul.f32 %v703, %v710
        %v714 = vsel %vm468, %v712, 0.0
        %v715 = vsel %vm468, %v713, 0.0
        %v716 = vadd.f32 %v714, %v715
        %v717 = vrot.slane %v716, 4
        %v718 = vadd.f32 %v716, %v717
        %v719 = vrot.slane %v718, 2
        %v720 = vadd.f32 %v718, %v719
        %v721 = vrot.slane %v720, 1
        %v722 = vadd.f32 %v720, %v721
        %v723 = vperm.slane %v529, 4
        %v724 = vmul.f32 %v723, %v551
        %v725 = vmul.f32 %v723, %v552
        %v726 = vmul.f32 %v724, 1.442695
        %v727 = vpow.pop %v726
        %v728 = vmul.f32 %v725, 1.442695
        %v729 = vpow.pop %v728
        %v730 = vmul.f32 %v727, %v702
        %v731 = vmul.f32 %v729, %v703
        %732 = vset.pattern.permute.xlu0 4
        %733 = vperm.xlu0 %732, %v431
        %v734 = vpop.permute.xlu0 %733
        %736 = vset.pattern.permute.xlu0 4
        %737 = vperm.xlu0 %736, %v432
        %v738 = vpop.permute.xlu0 %737
        %v740 = vperm.slane %v530, 4
        %v741 = vmul.f32 %v734, %v740
        %v742 = vmul.f32 %v738, %v740
        %v743 = vadd.f32 %v730, %v741
        %v744 = vadd.f32 %v731, %v742
        %745 = vset.pattern.permute.xlu0 4
        %746 = vperm.xlu0 %745, %v433
        %v747 = vpop.permute.xlu0 %746
        %749 = vset.pattern.permute.xlu0 4
        %750 = vperm.xlu0 %749, %v434
        %v751 = vpop.permute.xlu0 %750
        %v753 = vmul.f32 %v743, %v747
        %v754 = vmul.f32 %v744, %v751
        %v755 = vsel %vm468, %v753, 0.0
        %v756 = vsel %vm468, %v754, 0.0
        %v757 = vadd.f32 %v755, %v756
        %v758 = vrot.slane %v757, 4
        %v759 = vadd.f32 %v757, %v758
        %v760 = vrot.slane %v759, 2
        %v761 = vadd.f32 %v759, %v760
        %v762 = vrot.slane %v761, 1
        %v763 = vadd.f32 %v761, %v762
        %v764 = vperm.slane %v529, 5
        %v765 = vmul.f32 %v764, %v551
        %v766 = vmul.f32 %v764, %v552
        %v767 = vmul.f32 %v765, 1.442695
        %v768 = vpow.pop %v767
        %v769 = vmul.f32 %v766, 1.442695
        %v770 = vpow.pop %v769
        %v771 = vmul.f32 %v768, %v743
        %v772 = vmul.f32 %v770, %v744
        %773 = vset.pattern.permute.xlu0 5
        %774 = vperm.xlu0 %773, %v431
        %v775 = vpop.permute.xlu0 %774
        %777 = vset.pattern.permute.xlu0 5
        %778 = vperm.xlu0 %777, %v432
        %v779 = vpop.permute.xlu0 %778
        %v781 = vperm.slane %v530, 5
        %v782 = vmul.f32 %v775, %v781
        %v783 = vmul.f32 %v779, %v781
        %v784 = vadd.f32 %v771, %v782
        %v785 = vadd.f32 %v772, %v783
        %786 = vset.pattern.permute.xlu0 5
        %787 = vperm.xlu0 %786, %v433
        %v788 = vpop.permute.xlu0 %787
        %790 = vset.pattern.permute.xlu0 5
        %791 = vperm.xlu0 %790, %v434
        %v792 = vpop.permute.xlu0 %791
        %v794 = vmul.f32 %v784, %v788
        %v795 = vmul.f32 %v785, %v792
        %v796 = vsel %vm468, %v794, 0.0
        %v797 = vsel %vm468, %v795, 0.0
        %v798 = vadd.f32 %v796, %v797
        %v799 = vrot.slane %v798, 4
        %v800 = vadd.f32 %v798, %v799
        %v801 = vrot.slane %v800, 2
        %v802 = vadd.f32 %v800, %v801
        %v803 = vrot.slane %v802, 1
        %v804 = vadd.f32 %v802, %v803
        %v805 = vperm.slane %v529, 6
        %v806 = vmul.f32 %v805, %v551
        %v807 = vmul.f32 %v805, %v552
        %v808 = vmul.f32 %v806, 1.442695
        %v809 = vpow.pop %v808
        %v810 = vmul.f32 %v807, 1.442695
        %v811 = vpow.pop %v810
        %v812 = vmul.f32 %v809, %v784
        %v813 = vmul.f32 %v811, %v785
        %814 = vset.pattern.permute.xlu0 6
        %815 = vperm.xlu0 %814, %v431
        %v816 = vpop.permute.xlu0 %815
        %818 = vset.pattern.permute.xlu0 6
        %819 = vperm.xlu0 %818, %v432
        %v820 = vpop.permute.xlu0 %819
        %v822 = vperm.slane %v530, 6
        %v823 = vmul.f32 %v816, %v822
        %v824 = vmul.f32 %v820, %v822
        %v825 = vadd.f32 %v812, %v823
        %v826 = vadd.f32 %v813, %v824
        %827 = vset.pattern.permute.xlu0 6
        %828 = vperm.xlu0 %827, %v433
        %v829 = vpop.permute.xlu0 %828
        %831 = vset.pattern.permute.xlu0 6
        %832 = vperm.xlu0 %831, %v434
        %v833 = vpop.permute.xlu0 %832
        %v835 = vmul.f32 %v825, %v829
        %v836 = vmul.f32 %v826, %v833
        %v837 = vsel %vm468, %v835, 0.0
        %v838 = vsel %vm468, %v836, 0.0
        %v839 = vadd.f32 %v837, %v838
        %v840 = vrot.slane %v839, 4
        %v841 = vadd.f32 %v839, %v840
        %v842 = vrot.slane %v841, 2
        %v843 = vadd.f32 %v841, %v842
        %v844 = vrot.slane %v843, 1
        %v845 = vadd.f32 %v843, %v844
        %v846 = vperm.slane %v529, 7
        %v847 = vmul.f32 %v846, %v551
        %v848 = vmul.f32 %v846, %v552
        %v849 = vmul.f32 %v847, 1.442695
        %v850 = vpow.pop %v849
        %v851 = vmul.f32 %v848, 1.442695
        %v852 = vpow.pop %v851
        %v853 = vmul.f32 %v850, %v825
        %v854 = vmul.f32 %v852, %v826
        %855 = vset.pattern.permute.xlu0 7
        %856 = vperm.xlu0 %855, %v431
        %v857 = vpop.permute.xlu0 %856
        %859 = vset.pattern.permute.xlu0 7
        %860 = vperm.xlu0 %859, %v432
        %v861 = vpop.permute.xlu0 %860
        %v863 = vperm.slane %v530, 7
        %v864 = vmul.f32 %v857, %v863
        %v865 = vmul.f32 %v861, %v863
        %v866 = vadd.f32 %v853, %v864
        %v867 = vadd.f32 %v854, %v865
        %868 = vset.pattern.permute.xlu0 7
        %869 = vperm.xlu0 %868, %v433
        %v870 = vpop.permute.xlu0 %869
        %872 = vset.pattern.permute.xlu0 7
        %873 = vperm.xlu0 %872, %v434
        %v874 = vpop.permute.xlu0 %873
        %v876 = vmul.f32 %v866, %v870
        %v877 = vmul.f32 %v867, %v874
        %v878 = vsel %vm468, %v876, 0.0
        %v879 = vsel %vm468, %v877, 0.0
        %v880 = vadd.f32 %v878, %v879
        %v881 = vrot.slane %v880, 4
        %v882 = vadd.f32 %v880, %v881
        %v883 = vrot.slane %v882, 2
        %v884 = vadd.f32 %v882, %v883
        %v885 = vrot.slane %v884, 1
        %v886 = vadd.f32 %v884, %v885
        %887 = vst.msk [vmem:[#allocation2] sm:$0xff] %vm468, %v866
        %888 = vst.msk [vmem:[#allocation2 + $0x8] sm:$0xff] %vm468, %v867
        %v889 = vsel %vm495, %v599, %v640
        %vm890 = vcmask 1041408
        %v891 = vsel %vm890, %v889, %v681
        %vm892 = vcmask 1042432
        %v893 = vsel %vm892, %v891, %v722
        %vm894 = vcmask 1043456
        %v895 = vsel %vm894, %v893, %v763
        %vm896 = vcmask 1044480
        %v897 = vsel %vm896, %v895, %v804
        %vm898 = vcmask 1045504
        %v899 = vsel %vm898, %v897, %v845
        %vm900 = vcmask 1046528
        %v901 = vsel %vm900, %v899, %v886
        %v902 = vld [vmem:[%s7] sm:$0x1]
        %v904 = vperm.slane %v902, 0
        %v906 = vmul.f32 %v904, %v429
        %v907 = vadd.f32 %v901, %v906
        %v908 = vmul.f32 %v907, %v550
        %v909 = vpack.c.bf16 %v908, %v908
        %v910 = vld [vmem:[%s8] sm:$0xf]
        %v911 = vld [vmem:[%s8 + $0x4] sm:$0xf]
        %v912 = vld [vmem:[%s8 + $0x8] sm:$0xf]
        %v913 = vld [vmem:[%s8 + $0xc] sm:$0xf]
        %v914 = vld [vmem:[%s8 + $0x10] sm:$0xf]
        %v915 = vld [vmem:[%s8 + $0x14] sm:$0xf]
        %v916 = vld [vmem:[%s8 + $0x18] sm:$0xf]
        %v917 = vld [vmem:[%s8 + $0x1c] sm:$0xf]
        %v926 = vunpack.c.l.b16 %v910
        %v927 = vunpack.c.l.b16 %v911
        %v928 = vunpack.c.l.b16 %v912
        %v929 = vunpack.c.l.b16 %v913
        %v930 = vunpack.c.l.b16 %v914
        %v931 = vunpack.c.l.b16 %v915
        %v932 = vunpack.c.l.b16 %v916
        %v933 = vunpack.c.l.b16 %v917
        %v934 = vpack.c.b16 %v927, %v926
        %v935 = vpack.c.b16 %v929, %v928
        %v936 = vpack.c.b16 %v931, %v930
        %v937 = vpack.c.b16 %v933, %v932
        %v943 = vsel %vm468, %v909, 0
        %945 = vmatpush.bf16.msra.mxu0 0
        %946 = vmatpush.bf16.msra.mxu0 0
        %947 = vmatpush.bf16.msra.mxu0 0
        %948 = vmatpush.bf16.msra.mxu0 0
        %949 = vmatpush.bf16.msra.mxu0 %v937
        %950 = vmatpush.bf16.msra.mxu0 %v936
        %951 = vmatpush.bf16.msra.mxu0 %v935
        %952 = vmatpush.bf16.msra.mxu0 %v934
        %953 = vmatmul.bf16.gmra.mxu0 %v943
        %v954 = vpop.f32.mrf.mxu0
        %v955 = vadd.f32 0.0, %v954
        %v956 = vpop.f32.mrf.mxu0
        %957 = vdwg.mxu0
        %vm958 = vcmask 261120
        %959 = vst.msk [vmem:[%s395] sm:$0xff] %vm958, %v955
        %s960 = sand.u32 %s255, 1
        %s961 = scalar_lea.sflag [#allocation4], %s960
        %s962 = sand.u32 %s255, 1
        %s963 = smul.addr %s962, 8
        %s964 = scalar_lea.vmem [#allocation3], %s963
        // Predicated region
        $region61: #{condition_modulation_block.7} parent=55 // pred_check
          %p965 = pneg %p265
        $region62: #{condition_modulation_block.7} parent=55 // pred_check_branch
          %967 = sbr.rel (%p965) target = $region64
        $region63: #{condition_modulation_block.7} parent=55 // pred_region
          %969 = vsyncadd %s961, 0
          %s970 = smul.addr %s27, 2
          %s971 = sadd.s32 %s28, %s970
          %s972 = smul.addr %s971, 8
          %s973 = scalar_lea.hbm %s9, %s972
          %s975 = sshll.u32 %s964, 4
          %s976 = int_to_ptr.vmem [resolvable:$true] %s975
          %s977 = sshll.u32 %s973, 4
          %s978 = int_to_ptr.hbm [resolvable:$true] %s977
          %980 = dma.vmem_to_hbm [thread:$0]  %s976, 128, %s978, %s961
        $region64: #{condition_modulation_block.7} parent=55 // pred_fallthru
          _
      $region56: #{condition_modulation_block.7} parent=5 // pred_fallthru
        _
      %p981 = scmp.le.s32.totalorder 2, %s18
      // Predicated region
      $region65: #{condition_modulation_block.7} parent=5 // pred_check
        %p982 = pneg %p981
      $region66: #{condition_modulation_block.7} parent=5 // pred_check_branch
        %984 = sbr.rel (%p982) target = $region68
      $region67: #{condition_modulation_block.7} parent=5 // pred_region
        %s985 = ssub.s32 %s18, 2
        // Predicated region
        $region69: #{condition_modulation_block.7} parent=67 // pred_check
          %p986 = pneg %p271
        $region70: #{condition_modulation_block.7} parent=67 // pred_check_branch
          %988 = sbr.rel (%p986) target = $region72
        $region71: #{condition_modulation_block.7} parent=67 // pred_region
          %s989 = sand.u32 %s256, 1
          %s990 = scalar_lea.sflag [#allocation4], %s989
          %s991 = sand.u32 %s256, 1
          %s992 = smul.addr %s991, 8
          %s993 = scalar_lea.vmem [#allocation3], %s992
          %995 = dma.done %s990, 128
        $region72: #{condition_modulation_block.7} parent=67 // pred_fallthru
          _
      $region68: #{condition_modulation_block.7} parent=5 // pred_fallthru
        _
    $region6: #{condition_modulation_block.7} parent=1 // loop_footer
      %s22 = sadd.s32 1, %s18
    $region7: #{condition_modulation_block.7} parent=1 // loop_footer_branch
      %17 = sbr.rel target = $region3
    $region8: #{condition_modulation_block.7} parent=1 // loop_exit
      _
    %996 = vsyncpa [#allocation4], 1
    %s997 = scalar_lea.sflag [#allocation4], 1
    %998 = vsyncpa %s997, 1

</llo_original>
